<compile_context>
chip_gen: v5e
topology: v5e:2x2
jax: 0.10.0
libtpu: 0.0.40
codegen_flags: <defaults>
</compile_context>

<pallas_src>
import jax
import jax.numpy as jnp
from jax.experimental import pallas as pl
from jax.experimental.pallas import tpu as pltpu

GNN_OUT = 512              # fixed by the module: projector = MLP(512, P, H)
BN_EPS = 1e-5
VMEM_LIMIT = 48 * 1024 * 1024      # safe on v7x (64 MiB physical); v5e/v6e have 128 MiB
X_RESIDENT_BYTES = 8 * 1024 * 1024  # keep features VMEM-resident below this size


def _round_up(x, m):
    return (x + m - 1) // m * m


def _pick_tiles(n):
    """Row tile TM, contraction tile TK (multiples of 128, TM <= TK) and padded
    node count Np (multiple of TK).  Large TK amortizes per-grid-step overhead
    on the HBM-bound Np x Np adjacency stream; TM is capped at Np/2 so the
    "parallel" row axis has >= 2 tiles (both v7x TensorCores get work)."""
    np128 = _round_up(n, 128)
    tk = 128
    for cand in (256, 512, 1024, 2048):
        # grow TK only while the extra zero padding stays <= 25 %
        if cand <= np128 and _round_up(n, cand) * 4 <= np128 * 5:
            tk = cand
    npad = _round_up(n, tk)
    tm = 128
    for cand in (256, 512):
        if cand <= tk and npad // cand >= 2:
            tm = cand
    return tm, tk, npad


def _pad2d(a, rows, cols, dtype):
    """Cast first, then zero-pad (never materializes a padded f32 copy)."""
    a = jnp.asarray(a, dtype)
    r, c = a.shape
    if (r, c) == (rows, cols):
        return a
    return jnp.pad(a, ((0, rows - r), (0, cols - c)))


# --------------------------------------------------------------------------
# Optional pre-pass (F >= 512): fold Wg into the features once: xw = x @ Wg.
# --------------------------------------------------------------------------
def _make_xw_kernel(mm_dtype):
    def kernel(x_ref, wg_ref, xw_ref):
        xw_ref[...] = jnp.dot(x_ref[...], wg_ref[...],
                              preferred_element_type=jnp.float32).astype(mm_dtype)
    return kernel


def _xw_matmul(x_p, wg_p, tm, mm_dtype):
    npad, fp = x_p.shape
    return pl.pallas_call(
        _make_xw_kernel(mm_dtype),
        out_shape=jax.ShapeDtypeStruct((npad, GNN_OUT), mm_dtype),
        grid=(npad // tm,),
        in_specs=[pl.BlockSpec((tm, fp), lambda i: (i, 0)),
                  pl.BlockSpec((fp, GNN_OUT), lambda i: (0, 0))],
        out_specs=pl.BlockSpec((tm, GNN_OUT), lambda i: (i, 0)),
        compiler_params=pltpu.CompilerParams(
            dimension_semantics=("parallel",),
            vmem_limit_bytes=VMEM_LIMIT),
    )(x_p, wg_p)


# --------------------------------------------------------------------------
# Pass 1: GCN (chosen contraction order) + Linear1, with BN partial statistics.
# --------------------------------------------------------------------------
def _make_pass1_kernel(tk, kt, mm_dtype, x_resident, fuse_wg):
    last_k = kt - 1  # static python int: no num_programs primitive needed

    def body(adj_ref, feat_ref, wg_ref, bg_ref, ag_ref, w1_ref, b1_ref,
             valid_ref, z_ref, stat_ref, acc_ref):
        # NOTE: all pl.program_id calls stay at kernel top level (never inside
        # a pl.when body) -- binding them inside a cond branch has no lowering
        # on the interpret fallback and is unnecessary on TPU.
        k = pl.program_id(1)

        if x_resident:
            feat = feat_ref[pl.ds(k * tk, tk), :]   # features are VMEM-resident
        else:
            feat = feat_ref[...]
        part = jnp.dot(adj_ref[...], feat, preferred_element_type=jnp.float32)

        @pl.when(k == 0)
        def _first():
            acc_ref[...] = part          # direct write, no zero-init round trip

        @pl.when(k > 0)
        def _accum():
            acc_ref[...] += part

        @pl.when(k == last_k)
        def _finalize():
            acc = acc_ref[...]
            if fuse_wg:
                # GCN tail: h = PReLU((adj @ x) @ Wg + bg)
                h = jnp.dot(acc.astype(mm_dtype), wg_ref[...],
                            preferred_element_type=jnp.float32)
            else:
                # Wg already folded into the features: acc = adj @ (x @ Wg)
                h = acc
            h = h + bg_ref[...]
            ag = ag_ref[0]
            h = jnp.where(h >= 0.0, h, ag * h)

            # Projector Linear1 (fused: h never leaves VMEM).
            z = jnp.dot(h.astype(mm_dtype), w1_ref[...],
                        preferred_element_type=jnp.float32)
            z = z + b1_ref[...]
            z_ref[...] = z.astype(z_ref.dtype)

            # Masked per-tile BN partial statistics (exclude padded rows),
            # computed from the f32 z so bf16 storage does not affect stats.
            zv = z * valid_ref[...]
            stat = jnp.concatenate(
                [jnp.sum(zv, axis=0, keepdims=True),
                 jnp.sum(zv * zv, axis=0, keepdims=True)], axis=0)   # (2, Hp)
            stat_ref[...] = stat[None]

    if fuse_wg:
        def kernel(adj_ref, x_ref, wg_ref, bg_ref, ag_ref, w1_ref, b1_ref,
                   valid_ref, z_ref, stat_ref, acc_ref):
            body(adj_ref, x_ref, wg_ref, bg_ref, ag_ref, w1_ref, b1_ref,
                 valid_ref, z_ref, stat_ref, acc_ref)
    else:
        def kernel(adj_ref, xw_ref, bg_ref, ag_ref, w1_ref, b1_ref,
                   valid_ref, z_ref, stat_ref, acc_ref):
            body(adj_ref, xw_ref, None, bg_ref, ag_ref, w1_ref, b1_ref,
                 valid_ref, z_ref, stat_ref, acc_ref)
    return kernel


# --------------------------------------------------------------------------
# Pass 2: BatchNorm (global batch stats) + PReLU + Linear2.
# --------------------------------------------------------------------------
def _make_pass2_kernel(mm_dtype):
    def kernel(z_ref, mean_ref, var_ref, gamma_ref, beta_ref, ap_ref,
               w2_ref, b2_ref, out_ref):
        z = z_ref[...].astype(jnp.float32)
        inv_std = jax.lax.rsqrt(var_ref[...] + BN_EPS)
        zn = (z - mean_ref[...]) * inv_std * gamma_ref[...] + beta_ref[...]
        ap = ap_ref[0]
        zp = jnp.where(zn >= 0.0, zn, ap * zn)
        out = jnp.dot(zp.astype(mm_dtype), w2_ref[...],
                      preferred_element_type=jnp.float32)
        out_ref[...] = out + b2_ref[...]
    return kernel


def graph_encoder_forward(adj, in_feats, params, sparse=False,
                          mm_dtype=jnp.bfloat16):
    """adj: (1,N,N) or (N,N); in_feats: (1,N,F) or (N,F). Returns (N, P) f32."""
    del sparse  # TODO(synk): sparse torch.spmm adjacency path not implemented.

    f32 = jnp.float32
    adj2d = adj.reshape(adj.shape[-2], adj.shape[-1])
    x2d = in_feats.reshape(-1, in_feats.shape[-1])
    N, F = x2d.shape
    assert adj2d.shape == (N, N)
    H = params["w1"].shape[1]
    P = params["w2"].shape[1]
    assert params["wg"].shape == (F, GNN_OUT)

    # ---- padding for lane density / MXU alignment ----
    Fp = _round_up(F, 128)
    Hp = _round_up(H, 128)
    Pp = _round_up(P, 128)
    TM, TK, Np = _pick_tiles(N)
    R, KT = Np // TM, Np // TK
    mm_bytes = jnp.dtype(mm_dtype).itemsize

    # ---- pad + cast operands (cast FIRST; zero padding keeps the math exact)
    adj_p = _pad2d(adj2d, Np, Np, mm_dtype)
    x_p = _pad2d(x2d, Np, Fp, mm_dtype)
    wg_p = _pad2d(params["wg"], Fp, GNN_OUT, mm_dtype)
    bg = jnp.asarray(params["bg"], f32).reshape(1, GNN_OUT)
    w1 = _pad2d(params["w1"], GNN_OUT, Hp, mm_dtype)
    b1 = _pad2d(jnp.asarray(params["b1"], f32).reshape(1, H), 1, Hp, f32)
    gamma = _pad2d(jnp.asarray(params["gamma"], f32).reshape(1, H), 1, Hp, f32)
    beta = _pad2d(jnp.asarray(params["beta"], f32).reshape(1, H), 1, Hp, f32)
    w2 = _pad2d(params["w2"], Hp, Pp, mm_dtype)
    b2 = _pad2d(jnp.asarray(params["b2"], f32).reshape(1, P), 1, Pp, f32)
    alpha_g = jnp.asarray(params["alpha_g"], f32).reshape(1)
    alpha_p = jnp.asarray(params["alpha_p"], f32).reshape(1)
    valid = (jnp.arange(Np) < N).astype(f32).reshape(Np, 1)

    # ---- contraction order chosen at trace time ----
    fuse_wg = Fp < GNN_OUT
    if fuse_wg:
        feat, feat_cols = x_p, Fp                         # (adj @ x) @ Wg
    else:
        feat = _xw_matmul(x_p, wg_p, TM, mm_dtype)        # adj @ (x @ Wg)
        feat_cols = GNN_OUT

    # ---- keep the feature matrix VMEM-resident when small enough ----
    x_resident = Np * feat_cols * mm_bytes <= X_RESIDENT_BYTES
    if x_resident:
        feat_spec = pl.BlockSpec((Np, feat_cols), lambda i, k: (0, 0))
    else:
        feat_spec = pl.BlockSpec((TK, feat_cols), lambda i, k: (k, 0))

    smem = pl.BlockSpec(memory_space=pltpu.MemorySpace.SMEM)

    in_specs = [pl.BlockSpec((TM, TK), lambda i, k: (i, k)), feat_spec]
    inputs = [adj_p, feat]
    if fuse_wg:
        in_specs.append(pl.BlockSpec((Fp, GNN_OUT), lambda i, k: (0, 0)))
        inputs.append(wg_p)
    in_specs += [
        pl.BlockSpec((1, GNN_OUT), lambda i, k: (0, 0)),     # bg
        smem,                                                # alpha_g scalar
        pl.BlockSpec((GNN_OUT, Hp), lambda i, k: (0, 0)),    # W1 (resident)
        pl.BlockSpec((1, Hp), lambda i, k: (0, 0)),          # b1
        pl.BlockSpec((TM, 1), lambda i, k: (i, 0)),          # valid-row mask
    ]
    inputs += [bg, alpha_g, w1, b1, valid]

    # ---------------- Pass 1 ----------------
    cost1 = pl.CostEstimate(
        flops=2 * Np * Np * feat_cols
              + (2 * Np * Fp * GNN_OUT if fuse_wg else 0)
              + 2 * Np * GNN_OUT * Hp,
        transcendentals=0,
        bytes_accessed=Np * Np * mm_bytes + Np * feat_cols * mm_bytes
                       + Np * Hp * mm_bytes)

    z_pad, stats = pl.pallas_call(
        _make_pass1_kernel(TK, KT, mm_dtype, x_resident, fuse_wg),
        out_shape=(
            jax.ShapeDtypeStruct((Np, Hp), mm_dtype),   # z (Linear1 output)
            jax.ShapeDtypeStruct((R, 2, Hp), f32),      # per-tile [sum, sumsq]
        ),
        grid=(R, KT),
        in_specs=in_specs,
        out_specs=(
            pl.BlockSpec((TM, Hp), lambda i, k: (i, 0)),
            pl.BlockSpec((1, 2, Hp), lambda i, k: (i, 0, 0)),
        ),
        scratch_shapes=[pltpu.VMEM((TM, feat_cols), jnp.float32)],
        compiler_params=pltpu.CompilerParams(
            dimension_semantics=("parallel", "arbitrary"),
            vmem_limit_bytes=VMEM_LIMIT),
        cost_estimate=cost1,
    )(*inputs)

    # Combine per-tile partial stats -> global train-mode batch statistics.
    # TODO(synk): E[z^2]-E[z]^2 in f32 can cancel for very large N / offset z;
    #             switch to a shifted / Welford combine if that becomes an issue.
    tot = jnp.sum(stats, axis=0)                          # (2, Hp)
    mean = (tot[0] / N)[None, :]                          # (1, Hp)
    var = jnp.maximum(tot[1] / N - mean[0] * mean[0], 0.0)[None, :]

    # ---------------- Pass 2 ----------------
    cost2 = pl.CostEstimate(
        flops=2 * Np * Hp * Pp + 10 * Np * Hp,
        transcendentals=Hp,
        bytes_accessed=Np * Hp * mm_bytes + Np * Pp * 4 + Hp * Pp * mm_bytes)

    out_pad = pl.pallas_call(
        _make_pass2_kernel(mm_dtype),
        out_shape=jax.ShapeDtypeStruct((Np, Pp), f32),
        grid=(R,),
        in_specs=[
            pl.BlockSpec((TM, Hp), lambda i: (i, 0)),     # z tile
            pl.BlockSpec((1, Hp), lambda i: (0, 0)),      # mean
            pl.BlockSpec((1, Hp), lambda i: (0, 0)),      # var
            pl.BlockSpec((1, Hp), lambda i: (0, 0)),      # gamma
            pl.BlockSpec((1, Hp), lambda i: (0, 0)),      # beta
            smem,                                         # alpha_p scalar
            pl.BlockSpec((Hp, Pp), lambda i: (0, 0)),     # W2
            pl.BlockSpec((1, Pp), lambda i: (0, 0)),      # b2
        ],
        out_specs=pl.BlockSpec((TM, Pp), lambda i: (i, 0)),
        compiler_params=pltpu.CompilerParams(
            dimension_semantics=("parallel",),
            vmem_limit_bytes=VMEM_LIMIT),
        cost_estimate=cost2,
    )(z_pad, mean, var, gamma, beta, alpha_p, w2, b2)

    return out_pad[:N, :P]


def init_params(key, in_dim, hidden, proj):
    ks = jax.random.split(key, 6)
    scale = 0.05
    return {
        # GCN: Linear(in_dim, 512, bias=False) + separate bias + PReLU
        "wg": scale * jax.random.normal(ks[0], (in_dim, GNN_OUT), jnp.float32),
        "bg": jnp.zeros((1, GNN_OUT), jnp.float32),
        "alpha_g": jnp.array([0.25], jnp.float32),
        # Projector: Linear(512,H) -> BN1d(H) -> PReLU -> Linear(H,P)
        "w1": scale * jax.random.normal(ks[1], (GNN_OUT, hidden), jnp.float32),
        "b1": scale * jax.random.normal(ks[2], (1, hidden), jnp.float32),
        "gamma": jnp.ones((1, hidden), jnp.float32),
        "beta": jnp.zeros((1, hidden), jnp.float32),
        "alpha_p": jnp.array([0.25], jnp.float32),
        "w2": scale * jax.random.normal(ks[3], (hidden, proj), jnp.float32),
        "b2": scale * jax.random.normal(ks[4], (1, proj), jnp.float32),
    }


def reference_forward(adj, in_feats, params):
    """Plain-JAX reference mirroring the PyTorch semantics (train-mode BN)."""
    dot = lambda a, b: jnp.dot(a, b, precision="highest")
    adj2d = adj.reshape(adj.shape[-2], adj.shape[-1])
    x2d = in_feats.reshape(-1, in_feats.shape[-1])
    h = dot(adj2d, dot(x2d, params["wg"])) + params["bg"]
    ag = params["alpha_g"][0]
    h = jnp.where(h >= 0, h, ag * h)
    z = dot(h, params["w1"]) + params["b1"]
    mean = jnp.mean(z, axis=0, keepdims=True)
    var = jnp.mean((z - mean) ** 2, axis=0, keepdims=True)
    zn = (z - mean) / jnp.sqrt(var + BN_EPS) * params["gamma"] + params["beta"]
    ap = params["alpha_p"][0]
    zp = jnp.where(zn >= 0, zn, ap * zn)
    return dot(zp, params["w2"]) + params["b2"]


if __name__ == "__main__":
    key = jax.random.PRNGKey(0)
    k_adj, k_x, k_p, k_x2, k_p2 = jax.random.split(key, 5)

    N, F_IN = 64, 16               # nodes, input feature dim
    HIDDEN, PROJ = 32, 16          # projection_hidden_size, projection_size

    # Inputs shaped like MERIT's: leading batch dim of 1 (dense adjacency path).
    adj = jax.random.uniform(k_adj, (1, N, N), jnp.float32)
    in_feats = jax.random.normal(k_x, (1, N, F_IN), jnp.float32)
    params = init_params(k_p, F_IN, HIDDEN, PROJ)
    ref = reference_forward(adj, in_feats, params)

    # 1) f32 matmul path: tight check of the kernel logic ((adj@x)@Wg branch).
    out_f32 = jax.block_until_ready(
        graph_encoder_forward(adj, in_feats, params, mm_dtype=jnp.float32))
    assert out_f32.shape == (N, PROJ), out_f32.shape
    assert jnp.allclose(out_f32, ref, atol=1e-3, rtol=1e-3), \
        "f32 kernel mismatch vs reference"

    # 2) default bf16 matmul path (performance configuration): looser tolerance.
    out_bf16 = jax.block_until_ready(graph_encoder_forward(adj, in_feats, params))
    assert out_bf16.shape == (N, PROJ), out_bf16.shape
    assert jnp.allclose(out_bf16, ref, atol=1e-1, rtol=1e-1), \
        "bf16 kernel mismatch vs reference"

    # 3) large-F branch (F >= 512): adj @ (x@Wg) contraction order.
    F_BIG = 640
    in_feats_big = jax.random.normal(k_x2, (1, N, F_BIG), jnp.float32)
    params_big = init_params(k_p2, F_BIG, HIDDEN, PROJ)
    ref_big = reference_forward(adj, in_feats_big, params_big)
    out_big = jax.block_until_ready(
        graph_encoder_forward(adj, in_feats_big, params_big,
                              mm_dtype=jnp.float32))
    assert out_big.shape == (N, PROJ), out_big.shape
    assert jnp.allclose(out_big, ref_big, atol=1e-3, rtol=1e-3), \
        "large-F kernel mismatch vs reference"

    print("KERNEL_OK")
</pallas_src>

<mosaic_0001>
module attributes {stable_mosaic.version = 11 : i64} {
  func.func @kernel(%arg0: i32, %arg1: i32, %arg2: memref<128x128xf32, #tpu.memory_space<vmem>>, %arg3: memref<128x128xf32, #tpu.memory_space<vmem>>, %arg4: memref<128x512xf32, #tpu.memory_space<vmem>>, %arg5: memref<1x512xf32, #tpu.memory_space<vmem>>, %arg6: memref<1xf32, #tpu.memory_space<smem>>, %arg7: memref<512x128xf32, #tpu.memory_space<vmem>>, %arg8: memref<1x128xf32, #tpu.memory_space<vmem>>, %arg9: memref<128x1xf32, #tpu.memory_space<vmem>>, %arg10: memref<128x128xf32, #tpu.memory_space<vmem>>, %arg11: memref<1x2x128xf32, #tpu.memory_space<vmem>>, %arg12: memref<128x128xf32, #tpu.memory_space<vmem>>) attributes {dimension_semantics = [#tpu.dimension_semantics<parallel>, #tpu.dimension_semantics<arbitrary>], iteration_bounds = array<i64: 1, 1>, scalar_prefetch = 0 : i64, scratch_operands = 1 : i64, tpu.core_type = #tpu.core_type<tc>, window_params = [{transform_indices = @transform_0, window_bounds = array<i64: 128, 128>}, {pipeline_mode = #tpu.pipeline_mode<synchronous>, transform_indices = @transform_1, window_bounds = array<i64: 128, 128>}, {pipeline_mode = #tpu.pipeline_mode<synchronous>, transform_indices = @transform_2, window_bounds = array<i64: 128, 512>}, {pipeline_mode = #tpu.pipeline_mode<synchronous>, transform_indices = @transform_3, window_bounds = array<i64: 1, 512>}, {transform_indices = @transform_4, window_bounds = array<i64: 1>}, {pipeline_mode = #tpu.pipeline_mode<synchronous>, transform_indices = @transform_5, window_bounds = array<i64: 512, 128>}, {pipeline_mode = #tpu.pipeline_mode<synchronous>, transform_indices = @transform_6, window_bounds = array<i64: 1, 128>}, {transform_indices = @transform_7, window_bounds = array<i64: 128, 1>}, {transform_indices = @transform_8, window_bounds = array<i64: 128, 128>}, {transform_indices = @transform_9, window_bounds = array<i64: 1, 2, 128>}]} {
    %c128_i32 = arith.constant 128 : i32
    %0 = arith.muli %arg1, %c128_i32 : i32
    %1 = arith.index_cast %0 : i32 to index
    %c0 = arith.constant 0 : index
    %2 = vector.load %arg3[%1, %c0] : memref<128x128xf32, #tpu.memory_space<vmem>>, vector<128x128xf32>
    %c0_0 = arith.constant 0 : index
    %c0_1 = arith.constant 0 : index
    %3 = vector.load %arg2[%c0_0, %c0_1] : memref<128x128xf32, #tpu.memory_space<vmem>>, vector<128x128xf32>
    %cst = arith.constant dense<0.000000e+00> : vector<128x128xf32>
    %4 = tpu.matmul %3, %2, %cst {dimension_numbers = #tpu.dot_dimension_numbers<[1], [0], [0], [1], [0, 0, 1, 1], [], []>} : vector<128x128xf32>, vector<128x128xf32>, vector<128x128xf32> -> vector<128x128xf32>
    %c0_i32 = arith.constant 0 : i32
    %5 = arith.cmpi eq, %arg1, %c0_i32 : i32
    %6 = arith.extui %5 : i1 to i32
    %c0_i32_2 = arith.constant 0 : i32
    %7 = arith.cmpi ne, %6, %c0_i32_2 : i32
    scf.if %7 {
      %c0_7 = arith.constant 0 : index
      %c0_8 = arith.constant 0 : index
      %14 = vector.load %arg12[%c0_7, %c0_8] : memref<128x128xf32, #tpu.memory_space<vmem>>, vector<128x128xf32>
      tpu.vector_store %arg12[%c0_7, %c0_8], %4 {strides = array<i32>} : memref<128x128xf32, #tpu.memory_space<vmem>>, vector<128x128xf32>,
    } else {
    }
    %c0_i32_3 = arith.constant 0 : i32
    %8 = arith.cmpi sgt, %arg1, %c0_i32_3 : i32
    %9 = arith.extui %8 : i1 to i32
    %c0_i32_4 = arith.constant 0 : i32
    %10 = arith.cmpi ne, %9, %c0_i32_4 : i32
    scf.if %10 {
      %c0_7 = arith.constant 0 : index
      %c0_8 = arith.constant 0 : index
      %14 = vector.load %arg12[%c0_7, %c0_8] : memref<128x128xf32, #tpu.memory_space<vmem>>, vector<128x128xf32>
      %15 = arith.addf %14, %4 : vector<128x128xf32>
      %c0_9 = arith.constant 0 : index
      %c0_10 = arith.constant 0 : index
      %16 = vector.load %arg12[%c0_9, %c0_10] : memref<128x128xf32, #tpu.memory_space<vmem>>, vector<128x128xf32>
      tpu.vector_store %arg12[%c0_9, %c0_10], %15 {strides = array<i32>} : memref<128x128xf32, #tpu.memory_space<vmem>>, vector<128x128xf32>,
    } else {
    }
    %c0_i32_5 = arith.constant 0 : i32
    %11 = arith.cmpi eq, %arg1, %c0_i32_5 : i32
    %12 = arith.extui %11 : i1 to i32
    %c0_i32_6 = arith.constant 0 : i32
    %13 = arith.cmpi ne, %12, %c0_i32_6 : i32
    scf.if %13 {
      %c0_7 = arith.constant 0 : index
      %c0_8 = arith.constant 0 : index
      %14 = vector.load %arg12[%c0_7, %c0_8] : memref<128x128xf32, #tpu.memory_space<vmem>>, vector<128x128xf32>
      %c0_9 = arith.constant 0 : index
      %c0_10 = arith.constant 0 : index
      %15 = vector.load %arg4[%c0_9, %c0_10] : memref<128x512xf32, #tpu.memory_space<vmem>>, vector<128x512xf32>
      %cst_11 = arith.constant dense<0.000000e+00> : vector<128x512xf32>
      %16 = tpu.matmul %14, %15, %cst_11 {dimension_numbers = #tpu.dot_dimension_numbers<[1], [0], [0], [1], [0, 0, 1, 1], [], []>} : vector<128x128xf32>, vector<128x512xf32>, vector<128x512xf32> -> vector<128x512xf32>
      %c0_12 = arith.constant 0 : index
      %c0_13 = arith.constant 0 : index
      %17 = vector.load %arg5[%c0_12, %c0_13] : memref<1x512xf32, #tpu.memory_space<vmem>>, vector<1x512xf32>
      %18 = vector.broadcast %17 : vector<1x512xf32> to vector<128x512xf32>
      %19 = arith.addf %16, %18 : vector<128x512xf32>
      %c0_14 = arith.constant 0 : index
      %20 = memref.load %arg6[%c0_14] : memref<1xf32, #tpu.memory_space<smem>>
      %cst_15 = arith.constant 0.000000e+00 : f32
      %21 = vector.broadcast %cst_15 : f32 to vector<128x512xf32>
      %22 = arith.cmpf oge, %19, %21 : vector<128x512xf32>
      %23 = vector.broadcast %20 : f32 to vector<128x512xf32>
      %24 = arith.mulf %23, %19 : vector<128x512xf32>
      %25 = arith.select %22, %19, %24 : vector<128x512xi1>, vector<128x512xf32>
      %c0_16 = arith.constant 0 : index
      %c0_17 = arith.constant 0 : index
      %26 = vector.load %arg7[%c0_16, %c0_17] : memref<512x128xf32, #tpu.memory_space<vmem>>, vector<512x128xf32>
      %cst_18 = arith.constant dense<0.000000e+00> : vector<128x128xf32>
      %27 = tpu.matmul %25, %26, %cst_18 {dimension_numbers = #tpu.dot_dimension_numbers<[1], [0], [0], [1], [0, 0, 1, 1], [], []>} : vector<128x512xf32>, vector<512x128xf32>, vector<128x128xf32> -> vector<128x128xf32>
      %c0_19 = arith.constant 0 : index
      %c0_20 = arith.constant 0 : index
      %28 = vector.load %arg8[%c0_19, %c0_20] : memref<1x128xf32, #tpu.memory_space<vmem>>, vector<1x128xf32>
      %29 = vector.broadcast %28 : vector<1x128xf32> to vector<128x128xf32>
      %30 = arith.addf %27, %29 : vector<128x128xf32>
      %c0_21 = arith.constant 0 : index
      %c0_22 = arith.constant 0 : index
      %31 = vector.load %arg10[%c0_21, %c0_22] : memref<128x128xf32, #tpu.memory_space<vmem>>, vector<128x128xf32>
      tpu.vector_store %arg10[%c0_21, %c0_22], %30 {strides = array<i32>} : memref<128x128xf32, #tpu.memory_space<vmem>>, vector<128x128xf32>,
      %c0_23 = arith.constant 0 : index
      %c0_24 = arith.constant 0 : index
      %32 = vector.load %arg9[%c0_23, %c0_24] : memref<128x1xf32, #tpu.memory_space<vmem>>, vector<128x1xf32>
      %33 = vector.broadcast %32 : vector<128x1xf32> to vector<128x128xf32>
      %34 = arith.mulf %30, %33 : vector<128x128xf32>
      %cst_25 = arith.constant dense<0.000000e+00> : vector<128xf32>
      %35 = vector.multi_reduction <add>, %34, %cst_25 [0] : vector<128x128xf32> to vector<128xf32>
      %36 = vector.shape_cast %35 : vector<128xf32> to vector<1x128xf32>
      %37 = arith.mulf %34, %34 : vector<128x128xf32>
      %cst_26 = arith.constant dense<0.000000e+00> : vector<128xf32>
      %38 = vector.multi_reduction <add>, %37, %cst_26 [0] : vector<128x128xf32> to vector<128xf32>
      %39 = vector.shape_cast %38 : vector<128xf32> to vector<1x128xf32>
      %40 = tpu.concatenate %36, %39 in 0 : vector<1x128xf32>, vector<1x128xf32> -> vector<2x128xf32>
      %41 = vector.shape_cast %40 : vector<2x128xf32> to vector<1x2x128xf32>
      %c0_27 = arith.constant 0 : index
      %c0_28 = arith.constant 0 : index
      %c0_29 = arith.constant 0 : index
      %42 = vector.load %arg11[%c0_27, %c0_28, %c0_29] : memref<1x2x128xf32, #tpu.memory_space<vmem>>, vector<1x2x128xf32>
      tpu.vector_store %arg11[%c0_27, %c0_28, %c0_29], %41 {strides = array<i32>} : memref<1x2x128xf32, #tpu.memory_space<vmem>>, vector<1x2x128xf32>,
    } else {
    }
    return
  }
  func.func @transform_0(%arg0: i32, %arg1: i32) -> (i32, i32) {
    %c0_i32 = arith.constant 0 : i32
    return %arg0, %arg1 : i32, i32
  }
  func.func @transform_1(%arg0: i32, %arg1: i32) -> (i32, i32) {
    %c0_i32 = arith.constant 0 : i32
    %c0_i32_0 = arith.constant 0 : i32
    %c0_i32_1 = arith.constant 0 : i32
    return %c0_i32, %c0_i32_0 : i32, i32
  }
  func.func @transform_2(%arg0: i32, %arg1: i32) -> (i32, i32) {
    %c0_i32 = arith.constant 0 : i32
    %c0_i32_0 = arith.constant 0 : i32
    %c0_i32_1 = arith.constant 0 : i32
    return %c0_i32, %c0_i32_0 : i32, i32
  }
  func.func @transform_3(%arg0: i32, %arg1: i32) -> (i32, i32) {
    %c0_i32 = arith.constant 0 : i32
    %c0_i32_0 = arith.constant 0 : i32
    %c0_i32_1 = arith.constant 0 : i32
    return %c0_i32, %c0_i32_0 : i32, i32
  }
  func.func @transform_4(%arg0: i32, %arg1: i32) -> i32 {
    %c0_i32 = arith.constant 0 : i32
    %c0_i32_0 = arith.constant 0 : i32
    return %c0_i32 : i32
  }
  func.func @transform_5(%arg0: i32, %arg1: i32) -> (i32, i32) {
    %c0_i32 = arith.constant 0 : i32
    %c0_i32_0 = arith.constant 0 : i32
    %c0_i32_1 = arith.constant 0 : i32
    return %c0_i32, %c0_i32_0 : i32, i32
  }
  func.func @transform_6(%arg0: i32, %arg1: i32) -> (i32, i32) {
    %c0_i32 = arith.constant 0 : i32
    %c0_i32_0 = arith.constant 0 : i32
    %c0_i32_1 = arith.constant 0 : i32
    return %c0_i32, %c0_i32_0 : i32, i32
  }
  func.func @transform_7(%arg0: i32, %arg1: i32) -> (i32, i32) {
    %c0_i32 = arith.constant 0 : i32
    %c0_i32_0 = arith.constant 0 : i32
    return %arg0, %c0_i32 : i32, i32
  }
  func.func @transform_8(%arg0: i32, %arg1: i32) -> (i32, i32) {
    %c0_i32 = arith.constant 0 : i32
    %c0_i32_0 = arith.constant 0 : i32
    return %arg0, %c0_i32 : i32, i32
  }
  func.func @transform_9(%arg0: i32, %arg1: i32) -> (i32, i32, i32) {
    %c0_i32 = arith.constant 0 : i32
    %c0_i32_0 = arith.constant 0 : i32
    %c0_i32_1 = arith.constant 0 : i32
    return %arg0, %c0_i32, %c0_i32_0 : i32, i32, i32
  }
}

</mosaic_0001>

<llo_original>
// kernel: tpu_custom_call.1
$region0: #{tpu_custom_call.1}
  #allocation0 [shape = 'u32[]', space=smem, size = 0x4, offset = 0x4, fixed_abs, tag = 'smem constant byte address 0x4 - core index']
  #allocation1 [shape = 'u32[72,128]{1,0:T(1,128)}', space=vmem, size = 0x9000, scoped, tag = 'internal scratch']
  #allocation2 [shape = 'f32[128,128]{1,0:T(8,128)}', space=vmem, size = 0x10000, scoped, tag = 'scratch operand']
  #allocation3 [shape = 'f32[1]{0:T(128)S(6)}', space=smem, size = 0x200, scoped, tag = 'scoped memory for tpu_custom_call.1']
  %s0 = inlined_call_operand.vmem [shape: f32[128,128], index: 0, kind: input, shape index: {}]
  %s1 = inlined_call_operand.hbm [shape: f32[128,128], index: 1, kind: input, shape index: {}]
  %s2 = inlined_call_operand.hbm [shape: f32[128,512], index: 2, kind: input, shape index: {}]
  %s3 = inlined_call_operand.vmem [shape: f32[1,512], index: 3, kind: input, shape index: {}]
  %s4 = inlined_call_operand.<no memory space> [shape: f32[1], index: 4, kind: input, shape index: {}]
  %s5 = inlined_call_operand.hbm [shape: f32[512,128], index: 5, kind: input, shape index: {}]
  %s6 = inlined_call_operand.vmem [shape: f32[1,128], index: 6, kind: input, shape index: {}]
  %s7 = inlined_call_operand.vmem [shape: f32[128,1], index: 7, kind: input, shape index: {}]
  %s8 = inlined_call_operand.hbm [shape: f32[128,128], index: 8, kind: output, shape index: {0}]
  %s9 = inlined_call_operand.hbm [shape: f32[1,2,128], index: 9, kind: output, shape index: {1}]
  %10 = xla_tuple %s8, %s9
  %s11 = sld [smem:[#allocation0]]
  $region74: #{tpu_custom_call.1} parent=0
    _
  %s13 = ssub.s32 1, %s11
  %s14 = scalar_select 0, %s13, %s11
  %15 = sst [smem:[#allocation3]] %s4
  $region1: #{tpu_custom_call.1} parent=0
    #allocation4 [shape = 'u8[65536]{0}', space=vmem, size = 0x10000, scoped, tag = 'input window, operand 1, single buffered']
    #allocation5 [shape = 's32[1]{0}', space=sflag, size = 0x4, scoped, tag = 'scoped memory for tpu_custom_call.1']
    #allocation6 [shape = 's32[1]{0}', space=sflag, size = 0x4, scoped, tag = 'scoped memory for tpu_custom_call.1']
    #allocation7 [shape = 'u8[262144]{0}', space=vmem, size = 0x40000, scoped, tag = 'input window, operand 2, single buffered']
    #allocation8 [shape = 's32[1]{0}', space=sflag, size = 0x4, scoped, tag = 'scoped memory for tpu_custom_call.1']
    #allocation9 [shape = 'u8[262144]{0}', space=vmem, size = 0x40000, scoped, tag = 'input window, operand 5, single buffered']
    #allocation10 [shape = 'u8[65536]{0}', space=vmem, size = 0x10000, scoped, tag = 'output window, operand 0, single buffered']
    #allocation11 [shape = 'u8[1024]{0}', space=vmem, size = 0x400, scoped, tag = 'output window, operand 1, single buffered']
    #allocation12 [shape = 's32[1]{0}', space=sflag, size = 0x4, scoped, tag = 'scoped memory for tpu_custom_call.1']
    %16 = vsyncpa [#allocation5], 0
    %17 = vsyncpa [#allocation8], 0
    %18 = vsyncpa [#allocation6], 0
    %19 = vsyncpa [#allocation12], 0
    // Predicated region
    $region2: #{tpu_custom_call.1} parent=1 // pred_check
      _
    $region3: #{tpu_custom_call.1} parent=1 // pred_check_branch
      %21 = sbr.rel (0) target = $region5
    $region4: #{tpu_custom_call.1} parent=1 // pred_region
      _
    $region5: #{tpu_custom_call.1} parent=1 // pred_fallthru
      _
    // Predicated region
    $region6: #{tpu_custom_call.1} parent=1 // pred_check
      _
    $region7: #{tpu_custom_call.1} parent=1 // pred_check_branch
      %23 = sbr.rel (0) target = $region9
    $region8: #{tpu_custom_call.1} parent=1 // pred_region
      %25 = vsyncadd [#allocation5], 0
      %s26 = sshll.u32 %s1, 4
      %s27 = int_to_ptr.hbm [resolvable:$true] %s26
      %s28 = sshll.u32 [#allocation4], 4
      %s29 = int_to_ptr.vmem [resolvable:$true] %s28
      %34 = dma.hbm_to_vmem [thread:$0]  %s27, 2048, %s29, [#allocation5], 128, 128, 8
    $region9: #{tpu_custom_call.1} parent=1 // pred_fallthru
      _
    // Predicated region
    $region10: #{tpu_custom_call.1} parent=1 // pred_check
      _
    $region11: #{tpu_custom_call.1} parent=1 // pred_check_branch
      %36 = sbr.rel (0) target = $region13
    $region12: #{tpu_custom_call.1} parent=1 // pred_region
      %38 = vsyncadd [#allocation8], 0
      %s39 = sshll.u32 %s2, 4
      %s40 = int_to_ptr.hbm [resolvable:$true] %s39
      %s41 = sshll.u32 [#allocation7], 4
      %s42 = int_to_ptr.vmem [resolvable:$true] %s41
      %47 = dma.hbm_to_vmem [thread:$0]  %s40, 8192, %s42, [#allocation8], 512, 512, 32
    $region13: #{tpu_custom_call.1} parent=1 // pred_fallthru
      _
    // Predicated region
    $region14: #{tpu_custom_call.1} parent=1 // pred_check
      _
    $region15: #{tpu_custom_call.1} parent=1 // pred_check_branch
      %49 = sbr.rel (0) target = $region17
    $region16: #{tpu_custom_call.1} parent=1 // pred_region
      _
    $region17: #{tpu_custom_call.1} parent=1 // pred_fallthru
      _
    // Predicated region
    $region18: #{tpu_custom_call.1} parent=1 // pred_check
      _
    $region19: #{tpu_custom_call.1} parent=1 // pred_check_branch
      %51 = sbr.rel (0) target = $region21
    $region20: #{tpu_custom_call.1} parent=1 // pred_region
      _
    $region21: #{tpu_custom_call.1} parent=1 // pred_fallthru
      _
    // Predicated region
    $region22: #{tpu_custom_call.1} parent=1 // pred_check
      _
    $region23: #{tpu_custom_call.1} parent=1 // pred_check_branch
      %53 = sbr.rel (0) target = $region25
    $region24: #{tpu_custom_call.1} parent=1 // pred_region
      %55 = vsyncadd [#allocation8], 0
      %s56 = sshll.u32 %s5, 4
      %s57 = int_to_ptr.hbm [resolvable:$true] %s56
      %s58 = sshll.u32 [#allocation9], 4
      %s59 = int_to_ptr.vmem [resolvable:$true] %s58
      %64 = dma.hbm_to_vmem [thread:$0]  %s57, 8192, %s59, [#allocation8], 128, 128, 8
    $region25: #{tpu_custom_call.1} parent=1 // pred_fallthru
      _
    // Predicated region
    $region26: #{tpu_custom_call.1} parent=1 // pred_check
      _
    $region27: #{tpu_custom_call.1} parent=1 // pred_check_branch
      %66 = sbr.rel (0) target = $region29
    $region28: #{tpu_custom_call.1} parent=1 // pred_region
      _
    $region29: #{tpu_custom_call.1} parent=1 // pred_fallthru
      _
    // Predicated region
    $region30: #{tpu_custom_call.1} parent=1 // pred_check
      _
    $region31: #{tpu_custom_call.1} parent=1 // pred_check_branch
      %68 = sbr.rel (0) target = $region33
    $region32: #{tpu_custom_call.1} parent=1 // pred_region
      _
    $region33: #{tpu_custom_call.1} parent=1 // pred_fallthru
      _
    // Predicated region
    $region34: #{tpu_custom_call.1} parent=1 // pred_check
      _
    $region35: #{tpu_custom_call.1} parent=1 // pred_check_branch
      %70 = sbr.rel (0) target = $region37
    $region36: #{tpu_custom_call.1} parent=1 // pred_region
      %72 = dma.done [#allocation5], 2048
    $region37: #{tpu_custom_call.1} parent=1 // pred_fallthru
      _
    // Predicated region
    $region38: #{tpu_custom_call.1} parent=1 // pred_check
      _
    $region39: #{tpu_custom_call.1} parent=1 // pred_check_branch
      %74 = sbr.rel (0) target = $region41
    $region40: #{tpu_custom_call.1} parent=1 // pred_region
      %76 = dma.done [#allocation8], 8192
    $region41: #{tpu_custom_call.1} parent=1 // pred_fallthru
      _
    // Predicated region
    $region42: #{tpu_custom_call.1} parent=1 // pred_check
      _
    $region43: #{tpu_custom_call.1} parent=1 // pred_check_branch
      %78 = sbr.rel (0) target = $region45
    $region44: #{tpu_custom_call.1} parent=1 // pred_region
      %80 = dma.done [#allocation8], 8192
    $region45: #{tpu_custom_call.1} parent=1 // pred_fallthru
      _
    %s81 = smul.u32 0, 128
    %s82 = scalar_lea.vmem [#allocation4], %s81
    %v83 = vld [vmem:[%s82] sm:$0xff]
    %v84 = vld [vmem:[%s82 + $0x8] sm:$0xff]
    %v85 = vld [vmem:[%s82 + $0x10] sm:$0xff]
    %v86 = vld [vmem:[%s82 + $0x18] sm:$0xff]
    %v87 = vld [vmem:[%s82 + $0x20] sm:$0xff]
    %v88 = vld [vmem:[%s82 + $0x28] sm:$0xff]
    %v89 = vld [vmem:[%s82 + $0x30] sm:$0xff]
    %v90 = vld [vmem:[%s82 + $0x38] sm:$0xff]
    %v91 = vld [vmem:[%s82 + $0x40] sm:$0xff]
    %v92 = vld [vmem:[%s82 + $0x48] sm:$0xff]
    %v93 = vld [vmem:[%s82 + $0x50] sm:$0xff]
    %v94 = vld [vmem:[%s82 + $0x58] sm:$0xff]
    %v95 = vld [vmem:[%s82 + $0x60] sm:$0xff]
    %v96 = vld [vmem:[%s82 + $0x68] sm:$0xff]
    %v97 = vld [vmem:[%s82 + $0x70] sm:$0xff]
    %v98 = vld [vmem:[%s82 + $0x78] sm:$0xff]
    %v99 = vld [vmem:[%s0] sm:$0xff]
    %v100 = vld [vmem:[%s0 + $0x8] sm:$0xff]
    %v101 = vld [vmem:[%s0 + $0x10] sm:$0xff]
    %v102 = vld [vmem:[%s0 + $0x18] sm:$0xff]
    %v103 = vld [vmem:[%s0 + $0x20] sm:$0xff]
    %v104 = vld [vmem:[%s0 + $0x28] sm:$0xff]
    %v105 = vld [vmem:[%s0 + $0x30] sm:$0xff]
    %v106 = vld [vmem:[%s0 + $0x38] sm:$0xff]
    %v107 = vld [vmem:[%s0 + $0x40] sm:$0xff]
    %v108 = vld [vmem:[%s0 + $0x48] sm:$0xff]
    %v109 = vld [vmem:[%s0 + $0x50] sm:$0xff]
    %v110 = vld [vmem:[%s0 + $0x58] sm:$0xff]
    %v111 = vld [vmem:[%s0 + $0x60] sm:$0xff]
    %v112 = vld [vmem:[%s0 + $0x68] sm:$0xff]
    %v113 = vld [vmem:[%s0 + $0x70] sm:$0xff]
    %v114 = vld [vmem:[%s0 + $0x78] sm:$0xff]
    %115 = vmatpush.msra.mxu0 %v98
    %116 = vmatpush.msra.mxu0 %v97
    %117 = vmatpush.msra.mxu0 %v96
    %118 = vmatpush.msra.mxu0 %v95
    %119 = vmatpush.msra.mxu0 %v94
    %120 = vmatpush.msra.mxu0 %v93
    %121 = vmatpush.msra.mxu0 %v92
    %122 = vmatpush.msra.mxu0 %v91
    %123 = vmatpush.msra.mxu0 %v90
    %124 = vmatpush.msra.mxu0 %v89
    %125 = vmatpush.msra.mxu0 %v88
    %126 = vmatpush.msra.mxu0 %v87
    %127 = vmatpush.msra.mxu0 %v86
    %128 = vmatpush.msra.mxu0 %v85
    %129 = vmatpush.msra.mxu0 %v84
    %130 = vmatpush.msra.mxu0 %v83
    %131 = vmatmul.f32.gmra.mxu0 %v99
    %v132 = vpop.f32.mrf.mxu0
    %v133 = vadd.f32 0.0, %v132
    %134 = vmatmul.f32.gmra.mxu0 %v100
    %v135 = vpop.f32.mrf.mxu0
    %v136 = vadd.f32 0.0, %v135
    %137 = vmatmul.f32.gmra.mxu0 %v101
    %v138 = vpop.f32.mrf.mxu0
    %v139 = vadd.f32 0.0, %v138
    %140 = vmatmul.f32.gmra.mxu0 %v102
    %v141 = vpop.f32.mrf.mxu0
    %v142 = vadd.f32 0.0, %v141
    %143 = vmatmul.f32.gmra.mxu0 %v103
    %v144 = vpop.f32.mrf.mxu0
    %v145 = vadd.f32 0.0, %v144
    %146 = vmatmul.f32.gmra.mxu0 %v104
    %v147 = vpop.f32.mrf.mxu0
    %v148 = vadd.f32 0.0, %v147
    %149 = vmatmul.f32.gmra.mxu0 %v105
    %v150 = vpop.f32.mrf.mxu0
    %v151 = vadd.f32 0.0, %v150
    %152 = vmatmul.f32.gmra.mxu0 %v106
    %v153 = vpop.f32.mrf.mxu0
    %v154 = vadd.f32 0.0, %v153
    %155 = vmatmul.f32.gmra.mxu0 %v107
    %v156 = vpop.f32.mrf.mxu0
    %v157 = vadd.f32 0.0, %v156
    %158 = vmatmul.f32.gmra.mxu0 %v108
    %v159 = vpop.f32.mrf.mxu0
    %v160 = vadd.f32 0.0, %v159
    %161 = vmatmul.f32.gmra.mxu0 %v109
    %v162 = vpop.f32.mrf.mxu0
    %v163 = vadd.f32 0.0, %v162
    %164 = vmatmul.f32.gmra.mxu0 %v110
    %v165 = vpop.f32.mrf.mxu0
    %v166 = vadd.f32 0.0, %v165
    %167 = vmatmul.f32.gmra.mxu0 %v111
    %v168 = vpop.f32.mrf.mxu0
    %v169 = vadd.f32 0.0, %v168
    %170 = vmatmul.f32.gmra.mxu0 %v112
    %v171 = vpop.f32.mrf.mxu0
    %v172 = vadd.f32 0.0, %v171
    %173 = vmatmul.f32.gmra.mxu0 %v113
    %v174 = vpop.f32.mrf.mxu0
    %v175 = vadd.f32 0.0, %v174
    %176 = vmatmul.f32.gmra.mxu0 %v114
    %v177 = vpop.f32.mrf.mxu0
    %v178 = vadd.f32 0.0, %v177
    %179 = vdwg.mxu0
    %p180 = scmp.eq.s32.totalorder 0, 0
    // Predicated region
    $region46: #{tpu_custom_call.1} parent=1 // pred_check
      %p181 = pneg %p180
    $region47: #{tpu_custom_call.1} parent=1 // pred_check_branch
      %183 = sbr.rel (%p181) target = $region49
    $region48: #{tpu_custom_call.1} parent=1 // pred_region
      %184 = vst [vmem:[#allocation2] sm:$0xff] %v133
      %185 = vst [vmem:[#allocation2 + $0x8] sm:$0xff] %v136
      %186 = vst [vmem:[#allocation2 + $0x10] sm:$0xff] %v139
      %187 = vst [vmem:[#allocation2 + $0x18] sm:$0xff] %v142
      %188 = vst [vmem:[#allocation2 + $0x20] sm:$0xff] %v145
      %189 = vst [vmem:[#allocation2 + $0x28] sm:$0xff] %v148
      %190 = vst [vmem:[#allocation2 + $0x30] sm:$0xff] %v151
      %191 = vst [vmem:[#allocation2 + $0x38] sm:$0xff] %v154
      %192 = vst [vmem:[#allocation2 + $0x40] sm:$0xff] %v157
      %193 = vst [vmem:[#allocation2 + $0x48] sm:$0xff] %v160
      %194 = vst [vmem:[#allocation2 + $0x50] sm:$0xff] %v163
      %195 = vst [vmem:[#allocation2 + $0x58] sm:$0xff] %v166
      %196 = vst [vmem:[#allocation2 + $0x60] sm:$0xff] %v169
      %197 = vst [vmem:[#allocation2 + $0x68] sm:$0xff] %v172
      %198 = vst [vmem:[#allocation2 + $0x70] sm:$0xff] %v175
      %199 = vst [vmem:[#allocation2 + $0x78] sm:$0xff] %v178
    $region49: #{tpu_custom_call.1} parent=1 // pred_fallthru
      _
    %p200 = scmp.gt.s32.totalorder 0, 0
    // Predicated region
    $region50: #{tpu_custom_call.1} parent=1 // pred_check
      %p201 = pneg %p200
    $region51: #{tpu_custom_call.1} parent=1 // pred_check_branch
      %203 = sbr.rel (%p201) target = $region53
    $region52: #{tpu_custom_call.1} parent=1 // pred_region
      %v204 = vld [vmem:[#allocation2] sm:$0xff]
      %v205 = vld [vmem:[#allocation2 + $0x8] sm:$0xff]
      %v206 = vld [vmem:[#allocation2 + $0x10] sm:$0xff]
      %v207 = vld [vmem:[#allocation2 + $0x18] sm:$0xff]
      %v208 = vld [vmem:[#allocation2 + $0x20] sm:$0xff]
      %v209 = vld [vmem:[#allocation2 + $0x28] sm:$0xff]
      %v210 = vld [vmem:[#allocation2 + $0x30] sm:$0xff]
      %v211 = vld [vmem:[#allocation2 + $0x38] sm:$0xff]
      %v212 = vld [vmem:[#allocation2 + $0x40] sm:$0xff]
      %v213 = vld [vmem:[#allocation2 + $0x48] sm:$0xff]
      %v214 = vld [vmem:[#allocation2 + $0x50] sm:$0xff]
      %v215 = vld [vmem:[#allocation2 + $0x58] sm:$0xff]
      %v216 = vld [vmem:[#allocation2 + $0x60] sm:$0xff]
      %v217 = vld [vmem:[#allocation2 + $0x68] sm:$0xff]
      %v218 = vld [vmem:[#allocation2 + $0x70] sm:$0xff]
      %v219 = vld [vmem:[#allocation2 + $0x78] sm:$0xff]
      %v220 = vadd.f32 %v204, %v133
      %v221 = vadd.f32 %v205, %v136
      %v222 = vadd.f32 %v206, %v139
      %v223 = vadd.f32 %v207, %v142
      %v224 = vadd.f32 %v208, %v145
      %v225 = vadd.f32 %v209, %v148
      %v226 = vadd.f32 %v210, %v151
      %v227 = vadd.f32 %v211, %v154
      %v228 = vadd.f32 %v212, %v157
      %v229 = vadd.f32 %v213, %v160
      %v230 = vadd.f32 %v214, %v163
      %v231 = vadd.f32 %v215, %v166
      %v232 = vadd.f32 %v216, %v169
      %v233 = vadd.f32 %v217, %v172
      %v234 = vadd.f32 %v218, %v175
      %v235 = vadd.f32 %v219, %v178
      %236 = vst [vmem:[#allocation2] sm:$0xff] %v220
      %237 = vst [vmem:[#allocation2 + $0x8] sm:$0xff] %v221
      %238 = vst [vmem:[#allocation2 + $0x10] sm:$0xff] %v222
      %239 = vst [vmem:[#allocation2 + $0x18] sm:$0xff] %v223
      %240 = vst [vmem:[#allocation2 + $0x20] sm:$0xff] %v224
      %241 = vst [vmem:[#allocation2 + $0x28] sm:$0xff] %v225
      %242 = vst [vmem:[#allocation2 + $0x30] sm:$0xff] %v226
      %243 = vst [vmem:[#allocation2 + $0x38] sm:$0xff] %v227
      %244 = vst [vmem:[#allocation2 + $0x40] sm:$0xff] %v228
      %245 = vst [vmem:[#allocation2 + $0x48] sm:$0xff] %v229
      %246 = vst [vmem:[#allocation2 + $0x50] sm:$0xff] %v230
      %247 = vst [vmem:[#allocation2 + $0x58] sm:$0xff] %v231
      %248 = vst [vmem:[#allocation2 + $0x60] sm:$0xff] %v232
      %249 = vst [vmem:[#allocation2 + $0x68] sm:$0xff] %v233
      %250 = vst [vmem:[#allocation2 + $0x70] sm:$0xff] %v234
      %251 = vst [vmem:[#allocation2 + $0x78] sm:$0xff] %v235
    $region53: #{tpu_custom_call.1} parent=1 // pred_fallthru
      _
    // Predicated region
    $region54: #{tpu_custom_call.1} parent=1 // pred_check
      %p252 = pneg %p180
    $region55: #{tpu_custom_call.1} parent=1 // pred_check_branch
      %254 = sbr.rel (%p252) target = $region57
    $region56: #{tpu_custom_call.1} parent=1 // pred_region
      %v255 = vld [vmem:[#allocation2] sm:$0xff]
      %v256 = vld [vmem:[#allocation2 + $0x8] sm:$0xff]
      %v257 = vld [vmem:[#allocation2 + $0x10] sm:$0xff]
      %v258 = vld [vmem:[#allocation2 + $0x18] sm:$0xff]
      %v259 = vld [vmem:[#allocation2 + $0x20] sm:$0xff]
      %v260 = vld [vmem:[#allocation2 + $0x28] sm:$0xff]
      %v261 = vld [vmem:[#allocation2 + $0x30] sm:$0xff]
      %v262 = vld [vmem:[#allocation2 + $0x38] sm:$0xff]
      %v263 = vld [vmem:[#allocation2 + $0x40] sm:$0xff]
      %v264 = vld [vmem:[#allocation2 + $0x48] sm:$0xff]
      %v265 = vld [vmem:[#allocation2 + $0x50] sm:$0xff]
      %v266 = vld [vmem:[#allocation2 + $0x58] sm:$0xff]
      %v267 = vld [vmem:[#allocation2 + $0x60] sm:$0xff]
      %v268 = vld [vmem:[#allocation2 + $0x68] sm:$0xff]
      %v269 = vld [vmem:[#allocation2 + $0x70] sm:$0xff]
      %v270 = vld [vmem:[#allocation2 + $0x78] sm:$0xff]
      %v271 = vld [vmem:[#allocation7] sm:$0xff]
      %v272 = vld [vmem:[#allocation7 + $0x8] sm:$0xff]
      %v273 = vld [vmem:[#allocation7 + $0x10] sm:$0xff]
      %v274 = vld [vmem:[#allocation7 + $0x18] sm:$0xff]
      %v275 = vld [vmem:[#allocation7 + $0x20] sm:$0xff]
      %v276 = vld [vmem:[#allocation7 + $0x28] sm:$0xff]
      %v277 = vld [vmem:[#allocation7 + $0x30] sm:$0xff]
      %v278 = vld [vmem:[#allocation7 + $0x38] sm:$0xff]
      %v279 = vld [vmem:[#allocation7 + $0x40] sm:$0xff]
      %v280 = vld [vmem:[#allocation7 + $0x48] sm:$0xff]
      %v281 = vld [vmem:[#allocation7 + $0x50] sm:$0xff]
      %v282 = vld [vmem:[#allocation7 + $0x58] sm:$0xff]
      %v283 = vld [vmem:[#allocation7 + $0x60] sm:$0xff]
      %v284 = vld [vmem:[#allocation7 + $0x68] sm:$0xff]
      %v285 = vld [vmem:[#allocation7 + $0x70] sm:$0xff]
      %v286 = vld [vmem:[#allocation7 + $0x78] sm:$0xff]
      %v287 = vld [vmem:[#allocation7 + $0x80] sm:$0xff]
      %v288 = vld [vmem:[#allocation7 + $0x88] sm:$0xff]
      %v289 = vld [vmem:[#allocation7 + $0x90] sm:$0xff]
      %v290 = vld [vmem:[#allocation7 + $0x98] sm:$0xff]
      %v291 = vld [vmem:[#allocation7 + $0xa0] sm:$0xff]
      %v292 = vld [vmem:[#allocation7 + $0xa8] sm:$0xff]
      %v293 = vld [vmem:[#allocation7 + $0xb0] sm:$0xff]
      %v294 = vld [vmem:[#allocation7 + $0xb8] sm:$0xff]
      %v295 = vld [vmem:[#allocation7 + $0xc0] sm:$0xff]
      %v296 = vld [vmem:[#allocation7 + $0xc8] sm:$0xff]
      %v297 = vld [vmem:[#allocation7 + $0xd0] sm:$0xff]
      %v298 = vld [vmem:[#allocation7 + $0xd8] sm:$0xff]
      %v299 = vld [vmem:[#allocation7 + $0xe0] sm:$0xff]
      %v300 = vld [vmem:[#allocation7 + $0xe8] sm:$0xff]
      %v301 = vld [vmem:[#allocation7 + $0xf0] sm:$0xff]
      %v302 = vld [vmem:[#allocation7 + $0xf8] sm:$0xff]
      %v303 = vld [vmem:[#allocation7 + $0x100] sm:$0xff]
      %v304 = vld [vmem:[#allocation7 + $0x108] sm:$0xff]
      %v305 = vld [vmem:[#allocation7 + $0x110] sm:$0xff]
      %v306 = vld [vmem:[#allocation7 + $0x118] sm:$0xff]
      %v307 = vld [vmem:[#allocation7 + $0x120] sm:$0xff]
      %v308 = vld [vmem:[#allocation7 + $0x128] sm:$0xff]
      %v309 = vld [vmem:[#allocation7 + $0x130] sm:$0xff]
      %v310 = vld [vmem:[#allocation7 + $0x138] sm:$0xff]
      %v311 = vld [vmem:[#allocation7 + $0x140] sm:$0xff]
      %v312 = vld [vmem:[#allocation7 + $0x148] sm:$0xff]
      %v313 = vld [vmem:[#allocation7 + $0x150] sm:$0xff]
      %v314 = vld [vmem:[#allocation7 + $0x158] sm:$0xff]
      %v315 = vld [vmem:[#allocation7 + $0x160] sm:$0xff]
      %v316 = vld [vmem:[#allocation7 + $0x168] sm:$0xff]
      %v317 = vld [vmem:[#allocation7 + $0x170] sm:$0xff]
      %v318 = vld [vmem:[#allocation7 + $0x178] sm:$0xff]
      %v319 = vld [vmem:[#allocation7 + $0x180] sm:$0xff]
      %v320 = vld [vmem:[#allocation7 + $0x188] sm:$0xff]
      %v321 = vld [vmem:[#allocation7 + $0x190] sm:$0xff]
      %v322 = vld [vmem:[#allocation7 + $0x198] sm:$0xff]
      %v323 = vld [vmem:[#allocation7 + $0x1a0] sm:$0xff]
      %v324 = vld [vmem:[#allocation7 + $0x1a8] sm:$0xff]
      %v325 = vld [vmem:[#allocation7 + $0x1b0] sm:$0xff]
      %v326 = vld [vmem:[#allocation7 + $0x1b8] sm:$0xff]
      %v327 = vld [vmem:[#allocation7 + $0x1c0] sm:$0xff]
      %v328 = vld [vmem:[#allocation7 + $0x1c8] sm:$0xff]
      %v329 = vld [vmem:[#allocation7 + $0x1d0] sm:$0xff]
      %v330 = vld [vmem:[#allocation7 + $0x1d8] sm:$0xff]
      %v331 = vld [vmem:[#allocation7 + $0x1e0] sm:$0xff]
      %v332 = vld [vmem:[#allocation7 + $0x1e8] sm:$0xff]
      %v333 = vld [vmem:[#allocation7 + $0x1f0] sm:$0xff]
      %v334 = vld [vmem:[#allocation7 + $0x1f8] sm:$0xff]
      %v335 = vld [vmem:[%s3] sm:$0xf]
      %v337 = vperm.slane %v335, 0
      %v338 = vperm.slane %v335, 1
      %v339 = vperm.slane %v335, 2
      %v340 = vperm.slane %v335, 3
      %345 = vmatpush.msra.mxu0 %v331
      %346 = vmatpush.msra.mxu0 %v327
      %347 = vmatpush.msra.mxu0 %v323
      %348 = vmatpush.msra.mxu0 %v319
      %349 = vmatpush.msra.mxu0 %v315
      %350 = vmatpush.msra.mxu0 %v311
      %351 = vmatpush.msra.mxu0 %v307
      %352 = vmatpush.msra.mxu0 %v303
      %353 = vmatpush.msra.mxu0 %v299
      %354 = vmatpush.msra.mxu0 %v295
      %355 = vmatpush.msra.mxu0 %v291
      %356 = vmatpush.msra.mxu0 %v287
      %357 = vmatpush.msra.mxu0 %v283
      %358 = vmatpush.msra.mxu0 %v279
      %359 = vmatpush.msra.mxu0 %v275
      %360 = vmatpush.msra.mxu0 %v271
      %361 = vmatmul.f32.gmra.mxu0 %v255
      %v362 = vpop.f32.mrf.mxu0
      %v363 = vadd.f32 %v337, %v362
      %364 = vmatmul.f32.gmra.mxu0 %v256
      %v365 = vpop.f32.mrf.mxu0
      %v366 = vadd.f32 %v337, %v365
      %367 = vmatmul.f32.gmra.mxu0 %v257
      %v368 = vpop.f32.mrf.mxu0
      %v369 = vadd.f32 %v337, %v368
      %370 = vmatmul.f32.gmra.mxu0 %v258
      %v371 = vpop.f32.mrf.mxu0
      %v372 = vadd.f32 %v337, %v371
      %373 = vmatmul.f32.gmra.mxu0 %v259
      %v374 = vpop.f32.mrf.mxu0
      %v375 = vadd.f32 %v337, %v374
      %376 = vmatmul.f32.gmra.mxu0 %v260
      %v377 = vpop.f32.mrf.mxu0
      %v378 = vadd.f32 %v337, %v377
      %379 = vmatmul.f32.gmra.mxu0 %v261
      %v380 = vpop.f32.mrf.mxu0
      %v381 = vadd.f32 %v337, %v380
      %382 = vmatmul.f32.gmra.mxu0 %v262
      %v383 = vpop.f32.mrf.mxu0
      %v384 = vadd.f32 %v337, %v383
      %385 = vmatmul.f32.gmra.mxu0 %v263
      %v386 = vpop.f32.mrf.mxu0
      %v387 = vadd.f32 %v337, %v386
      %388 = vmatmul.f32.gmra.mxu0 %v264
      %v389 = vpop.f32.mrf.mxu0
      %v390 = vadd.f32 %v337, %v389
      %391 = vmatmul.f32.gmra.mxu0 %v265
      %v392 = vpop.f32.mrf.mxu0
      %v393 = vadd.f32 %v337, %v392
      %394 = vmatmul.f32.gmra.mxu0 %v266
      %v395 = vpop.f32.mrf.mxu0
      %v396 = vadd.f32 %v337, %v395
      %397 = vmatmul.f32.gmra.mxu0 %v267
      %v398 = vpop.f32.mrf.mxu0
      %v399 = vadd.f32 %v337, %v398
      %400 = vmatmul.f32.gmra.mxu0 %v268
      %v401 = vpop.f32.mrf.mxu0
      %v402 = vadd.f32 %v337, %v401
      %403 = vmatmul.f32.gmra.mxu0 %v269
      %v404 = vpop.f32.mrf.mxu0
      %v405 = vadd.f32 %v337, %v404
      %406 = vmatmul.f32.gmra.mxu0 %v270
      %v407 = vpop.f32.mrf.mxu0
      %v408 = vadd.f32 %v337, %v407
      %409 = vdwg.mxu0
      %410 = vmatpush.msra.mxu0 %v332
      %411 = vmatpush.msra.mxu0 %v328
      %412 = vmatpush.msra.mxu0 %v324
      %413 = vmatpush.msra.mxu0 %v320
      %414 = vmatpush.msra.mxu0 %v316
      %415 = vmatpush.msra.mxu0 %v312
      %416 = vmatpush.msra.mxu0 %v308
      %417 = vmatpush.msra.mxu0 %v304
      %418 = vmatpush.msra.mxu0 %v300
      %419 = vmatpush.msra.mxu0 %v296
      %420 = vmatpush.msra.mxu0 %v292
      %421 = vmatpush.msra.mxu0 %v288
      %422 = vmatpush.msra.mxu0 %v284
      %423 = vmatpush.msra.mxu0 %v280
      %424 = vmatpush.msra.mxu0 %v276
      %425 = vmatpush.msra.mxu0 %v272
      %426 = vmatmul.f32.gmra.mxu0 %v255
      %v427 = vpop.f32.mrf.mxu0
      %v428 = vadd.f32 %v338, %v427
      %429 = vmatmul.f32.gmra.mxu0 %v256
      %v430 = vpop.f32.mrf.mxu0
      %v431 = vadd.f32 %v338, %v430
      %432 = vmatmul.f32.gmra.mxu0 %v257
      %v433 = vpop.f32.mrf.mxu0
      %v434 = vadd.f32 %v338, %v433
      %435 = vmatmul.f32.gmra.mxu0 %v258
      %v436 = vpop.f32.mrf.mxu0
      %v437 = vadd.f32 %v338, %v436
      %438 = vmatmul.f32.gmra.mxu0 %v259
      %v439 = vpop.f32.mrf.mxu0
      %v440 = vadd.f32 %v338, %v439
      %441 = vmatmul.f32.gmra.mxu0 %v260
      %v442 = vpop.f32.mrf.mxu0
      %v443 = vadd.f32 %v338, %v442
      %444 = vmatmul.f32.gmra.mxu0 %v261
      %v445 = vpop.f32.mrf.mxu0
      %v446 = vadd.f32 %v338, %v445
      %447 = vmatmul.f32.gmra.mxu0 %v262
      %v448 = vpop.f32.mrf.mxu0
      %v449 = vadd.f32 %v338, %v448
      %450 = vmatmul.f32.gmra.mxu0 %v263
      %v451 = vpop.f32.mrf.mxu0
      %v452 = vadd.f32 %v338, %v451
      %453 = vmatmul.f32.gmra.mxu0 %v264
      %v454 = vpop.f32.mrf.mxu0
      %v455 = vadd.f32 %v338, %v454
      %456 = vmatmul.f32.gmra.mxu0 %v265
      %v457 = vpop.f32.mrf.mxu0
      %v458 = vadd.f32 %v338, %v457
      %459 = vmatmul.f32.gmra.mxu0 %v266
      %v460 = vpop.f32.mrf.mxu0
      %v461 = vadd.f32 %v338, %v460
      %462 = vmatmul.f32.gmra.mxu0 %v267
      %v463 = vpop.f32.mrf.mxu0
      %v464 = vadd.f32 %v338, %v463
      %465 = vmatmul.f32.gmra.mxu0 %v268
      %v466 = vpop.f32.mrf.mxu0
      %v467 = vadd.f32 %v338, %v466
      %468 = vmatmul.f32.gmra.mxu0 %v269
      %v469 = vpop.f32.mrf.mxu0
      %v470 = vadd.f32 %v338, %v469
      %471 = vmatmul.f32.gmra.mxu0 %v270
      %v472 = vpop.f32.mrf.mxu0
      %v473 = vadd.f32 %v338, %v472
      %474 = vdwg.mxu0
      %475 = vmatpush.msra.mxu0 %v333
      %476 = vmatpush.msra.mxu0 %v329
      %477 = vmatpush.msra.mxu0 %v325
      %478 = vmatpush.msra.mxu0 %v321
      %479 = vmatpush.msra.mxu0 %v317
      %480 = vmatpush.msra.mxu0 %v313
      %481 = vmatpush.msra.mxu0 %v309
      %482 = vmatpush.msra.mxu0 %v305
      %483 = vmatpush.msra.mxu0 %v301
      %484 = vmatpush.msra.mxu0 %v297
      %485 = vmatpush.msra.mxu0 %v293
      %486 = vmatpush.msra.mxu0 %v289
      %487 = vmatpush.msra.mxu0 %v285
      %488 = vmatpush.msra.mxu0 %v281
      %489 = vmatpush.msra.mxu0 %v277
      %490 = vmatpush.msra.mxu0 %v273
      %491 = vmatmul.f32.gmra.mxu0 %v255
      %v492 = vpop.f32.mrf.mxu0
      %v493 = vadd.f32 %v339, %v492
      %494 = vmatmul.f32.gmra.mxu0 %v256
      %v495 = vpop.f32.mrf.mxu0
      %v496 = vadd.f32 %v339, %v495
      %497 = vmatmul.f32.gmra.mxu0 %v257
      %v498 = vpop.f32.mrf.mxu0
      %v499 = vadd.f32 %v339, %v498
      %500 = vmatmul.f32.gmra.mxu0 %v258
      %v501 = vpop.f32.mrf.mxu0
      %v502 = vadd.f32 %v339, %v501
      %503 = vmatmul.f32.gmra.mxu0 %v259
      %v504 = vpop.f32.mrf.mxu0
      %v505 = vadd.f32 %v339, %v504
      %506 = vmatmul.f32.gmra.mxu0 %v260
      %v507 = vpop.f32.mrf.mxu0
      %v508 = vadd.f32 %v339, %v507
      %509 = vmatmul.f32.gmra.mxu0 %v261
      %v510 = vpop.f32.mrf.mxu0
      %v511 = vadd.f32 %v339, %v510
      %512 = vmatmul.f32.gmra.mxu0 %v262
      %v513 = vpop.f32.mrf.mxu0
      %v514 = vadd.f32 %v339, %v513
      %515 = vmatmul.f32.gmra.mxu0 %v263
      %v516 = vpop.f32.mrf.mxu0
      %v517 = vadd.f32 %v339, %v516
      %518 = vmatmul.f32.gmra.mxu0 %v264
      %v519 = vpop.f32.mrf.mxu0
      %v520 = vadd.f32 %v339, %v519
      %521 = vmatmul.f32.gmra.mxu0 %v265
      %v522 = vpop.f32.mrf.mxu0
      %v523 = vadd.f32 %v339, %v522
      %524 = vmatmul.f32.gmra.mxu0 %v266
      %v525 = vpop.f32.mrf.mxu0
      %v526 = vadd.f32 %v339, %v525
      %527 = vmatmul.f32.gmra.mxu0 %v267
      %v528 = vpop.f32.mrf.mxu0
      %v529 = vadd.f32 %v339, %v528
      %530 = vmatmul.f32.gmra.mxu0 %v268
      %v531 = vpop.f32.mrf.mxu0
      %v532 = vadd.f32 %v339, %v531
      %533 = vmatmul.f32.gmra.mxu0 %v269
      %v534 = vpop.f32.mrf.mxu0
      %v535 = vadd.f32 %v339, %v534
      %536 = vmatmul.f32.gmra.mxu0 %v270
      %v537 = vpop.f32.mrf.mxu0
      %v538 = vadd.f32 %v339, %v537
      %539 = vdwg.mxu0
      %540 = vmatpush.msra.mxu0 %v334
      %541 = vmatpush.msra.mxu0 %v330
      %542 = vmatpush.msra.mxu0 %v326
      %543 = vmatpush.msra.mxu0 %v322
      %544 = vmatpush.msra.mxu0 %v318
      %545 = vmatpush.msra.mxu0 %v314
      %546 = vmatpush.msra.mxu0 %v310
      %547 = vmatpush.msra.mxu0 %v306
      %548 = vmatpush.msra.mxu0 %v302
      %549 = vmatpush.msra.mxu0 %v298
      %550 = vmatpush.msra.mxu0 %v294
      %551 = vmatpush.msra.mxu0 %v290
      %552 = vmatpush.msra.mxu0 %v286
      %553 = vmatpush.msra.mxu0 %v282
      %554 = vmatpush.msra.mxu0 %v278
      %555 = vmatpush.msra.mxu0 %v274
      %556 = vmatmul.f32.gmra.mxu0 %v255
      %v557 = vpop.f32.mrf.mxu0
      %v558 = vadd.f32 %v340, %v557
      %559 = vmatmul.f32.gmra.mxu0 %v256
      %v560 = vpop.f32.mrf.mxu0
      %v561 = vadd.f32 %v340, %v560
      %562 = vmatmul.f32.gmra.mxu0 %v257
      %v563 = vpop.f32.mrf.mxu0
      %v564 = vadd.f32 %v340, %v563
      %565 = vmatmul.f32.gmra.mxu0 %v258
      %v566 = vpop.f32.mrf.mxu0
      %v567 = vadd.f32 %v340, %v566
      %568 = vmatmul.f32.gmra.mxu0 %v259
      %v569 = vpop.f32.mrf.mxu0
      %v570 = vadd.f32 %v340, %v569
      %571 = vmatmul.f32.gmra.mxu0 %v260
      %v572 = vpop.f32.mrf.mxu0
      %v573 = vadd.f32 %v340, %v572
      %574 = vmatmul.f32.gmra.mxu0 %v261
      %v575 = vpop.f32.mrf.mxu0
      %v576 = vadd.f32 %v340, %v575
      %577 = vmatmul.f32.gmra.mxu0 %v262
      %v578 = vpop.f32.mrf.mxu0
      %v579 = vadd.f32 %v340, %v578
      %580 = vmatmul.f32.gmra.mxu0 %v263
      %v581 = vpop.f32.mrf.mxu0
      %v582 = vadd.f32 %v340, %v581
      %583 = vmatmul.f32.gmra.mxu0 %v264
      %v584 = vpop.f32.mrf.mxu0
      %v585 = vadd.f32 %v340, %v584
      %586 = vmatmul.f32.gmra.mxu0 %v265
      %v587 = vpop.f32.mrf.mxu0
      %v588 = vadd.f32 %v340, %v587
      %589 = vmatmul.f32.gmra.mxu0 %v266
      %v590 = vpop.f32.mrf.mxu0
      %v591 = vadd.f32 %v340, %v590
      %592 = vmatmul.f32.gmra.mxu0 %v267
      %v593 = vpop.f32.mrf.mxu0
      %v594 = vadd.f32 %v340, %v593
      %595 = vmatmul.f32.gmra.mxu0 %v268
      %v596 = vpop.f32.mrf.mxu0
      %v597 = vadd.f32 %v340, %v596
      %598 = vmatmul.f32.gmra.mxu0 %v269
      %v599 = vpop.f32.mrf.mxu0
      %v600 = vadd.f32 %v340, %v599
      %601 = vmatmul.f32.gmra.mxu0 %v270
      %v602 = vpop.f32.mrf.mxu0
      %v603 = vadd.f32 %v340, %v602
      %604 = vdwg.mxu0
      %s605 = sld [smem:[#allocation3]]
      %vm606 = vcmp.ge.f32.partialorder %v363, 0.0
      %vm607 = vcmp.ge.f32.partialorder %v428, 0.0
      %vm608 = vcmp.ge.f32.partialorder %v493, 0.0
      %vm609 = vcmp.ge.f32.partialorder %v558, 0.0
      %vm610 = vcmp.ge.f32.partialorder %v366, 0.0
      %vm611 = vcmp.ge.f32.partialorder %v431, 0.0
      %vm612 = vcmp.ge.f32.partialorder %v496, 0.0
      %vm613 = vcmp.ge.f32.partialorder %v561, 0.0
      %vm614 = vcmp.ge.f32.partialorder %v369, 0.0
      %vm615 = vcmp.ge.f32.partialorder %v434, 0.0
      %vm616 = vcmp.ge.f32.partialorder %v499, 0.0
      %vm617 = vcmp.ge.f32.partialorder %v564, 0.0
      %vm618 = vcmp.ge.f32.partialorder %v372, 0.0
      %vm619 = vcmp.ge.f32.partialorder %v437, 0.0
      %vm620 = vcmp.ge.f32.partialorder %v502, 0.0
      %vm621 = vcmp.ge.f32.partialorder %v567, 0.0
      %vm622 = vcmp.ge.f32.partialorder %v375, 0.0
      %vm623 = vcmp.ge.f32.partialorder %v440, 0.0
      %vm624 = vcmp.ge.f32.partialorder %v505, 0.0
      %vm625 = vcmp.ge.f32.partialorder %v570, 0.0
      %vm626 = vcmp.ge.f32.partialorder %v378, 0.0
      %vm627 = vcmp.ge.f32.partialorder %v443, 0.0
      %vm628 = vcmp.ge.f32.partialorder %v508, 0.0
      %vm629 = vcmp.ge.f32.partialorder %v573, 0.0
      %vm630 = vcmp.ge.f32.partialorder %v381, 0.0
      %vm631 = vcmp.ge.f32.partialorder %v446, 0.0
      %vm632 = vcmp.ge.f32.partialorder %v511, 0.0
      %vm633 = vcmp.ge.f32.partialorder %v576, 0.0
      %vm634 = vcmp.ge.f32.partialorder %v384, 0.0
      %vm635 = vcmp.ge.f32.partialorder %v449, 0.0
      %vm636 = vcmp.ge.f32.partialorder %v514, 0.0
      %vm637 = vcmp.ge.f32.partialorder %v579, 0.0
      %vm638 = vcmp.ge.f32.partialorder %v387, 0.0
      %vm639 = vcmp.ge.f32.partialorder %v452, 0.0
      %vm640 = vcmp.ge.f32.partialorder %v517, 0.0
      %vm641 = vcmp.ge.f32.partialorder %v582, 0.0
      %vm642 = vcmp.ge.f32.partialorder %v390, 0.0
      %vm643 = vcmp.ge.f32.partialorder %v455, 0.0
      %vm644 = vcmp.ge.f32.partialorder %v520, 0.0
      %vm645 = vcmp.ge.f32.partialorder %v585, 0.0
      %vm646 = vcmp.ge.f32.partialorder %v393, 0.0
      %vm647 = vcmp.ge.f32.partialorder %v458, 0.0
      %vm648 = vcmp.ge.f32.partialorder %v523, 0.0
      %vm649 = vcmp.ge.f32.partialorder %v588, 0.0
      %vm650 = vcmp.ge.f32.partialorder %v396, 0.0
      %vm651 = vcmp.ge.f32.partialorder %v461, 0.0
      %vm652 = vcmp.ge.f32.partialorder %v526, 0.0
      %vm653 = vcmp.ge.f32.partialorder %v591, 0.0
      %vm654 = vcmp.ge.f32.partialorder %v399, 0.0
      %vm655 = vcmp.ge.f32.partialorder %v464, 0.0
      %vm656 = vcmp.ge.f32.partialorder %v529, 0.0
      %vm657 = vcmp.ge.f32.partialorder %v594, 0.0
      %vm658 = vcmp.ge.f32.partialorder %v402, 0.0
      %vm659 = vcmp.ge.f32.partialorder %v467, 0.0
      %vm660 = vcmp.ge.f32.partialorder %v532, 0.0
      %vm661 = vcmp.ge.f32.partialorder %v597, 0.0
      %vm662 = vcmp.ge.f32.partialorder %v405, 0.0
      %vm663 = vcmp.ge.f32.partialorder %v470, 0.0
      %vm664 = vcmp.ge.f32.partialorder %v535, 0.0
      %vm665 = vcmp.ge.f32.partialorder %v600, 0.0
      %vm666 = vcmp.ge.f32.partialorder %v408, 0.0
      %vm667 = vcmp.ge.f32.partialorder %v473, 0.0
      %vm668 = vcmp.ge.f32.partialorder %v538, 0.0
      %vm669 = vcmp.ge.f32.partialorder %v603, 0.0
      %v670 = vstv %s605
      %v671 = vmul.f32 %v670, %v363
      %v672 = vmul.f32 %v670, %v428
      %v673 = vmul.f32 %v670, %v493
      %v674 = vmul.f32 %v670, %v558
      %v675 = vmul.f32 %v670, %v366
      %v676 = vmul.f32 %v670, %v431
      %v677 = vmul.f32 %v670, %v496
      %v678 = vmul.f32 %v670, %v561
      %v679 = vmul.f32 %v670, %v369
      %v680 = vmul.f32 %v670, %v434
      %v681 = vmul.f32 %v670, %v499
      %v682 = vmul.f32 %v670, %v564
      %v683 = vmul.f32 %v670, %v372
      %v684 = vmul.f32 %v670, %v437
      %v685 = vmul.f32 %v670, %v502
      %v686 = vmul.f32 %v670, %v567
      %v687 = vmul.f32 %v670, %v375
      %v688 = vmul.f32 %v670, %v440
      %v689 = vmul.f32 %v670, %v505
      %v690 = vmul.f32 %v670, %v570
      %v691 = vmul.f32 %v670, %v378
      %v692 = vmul.f32 %v670, %v443
      %v693 = vmul.f32 %v670, %v508
      %v694 = vmul.f32 %v670, %v573
      %v695 = vmul.f32 %v670, %v381
      %v696 = vmul.f32 %v670, %v446
      %v697 = vmul.f32 %v670, %v511
      %v698 = vmul.f32 %v670, %v576
      %v699 = vmul.f32 %v670, %v384
      %v700 = vmul.f32 %v670, %v449
      %v701 = vmul.f32 %v670, %v514
      %v702 = vmul.f32 %v670, %v579
      %v703 = vmul.f32 %v670, %v387
      %v704 = vmul.f32 %v670, %v452
      %v705 = vmul.f32 %v670, %v517
      %v706 = vmul.f32 %v670, %v582
      %v707 = vmul.f32 %v670, %v390
      %v708 = vmul.f32 %v670, %v455
      %v709 = vmul.f32 %v670, %v520
      %v710 = vmul.f32 %v670, %v585
      %v711 = vmul.f32 %v670, %v393
      %v712 = vmul.f32 %v670, %v458
      %v713 = vmul.f32 %v670, %v523
      %v714 = vmul.f32 %v670, %v588
      %v715 = vmul.f32 %v670, %v396
      %v716 = vmul.f32 %v670, %v461
      %v717 = vmul.f32 %v670, %v526
      %v718 = vmul.f32 %v670, %v591
      %v719 = vmul.f32 %v670, %v399
      %v720 = vmul.f32 %v670, %v464
      %v721 = vmul.f32 %v670, %v529
      %v722 = vmul.f32 %v670, %v594
      %v723 = vmul.f32 %v670, %v402
      %v724 = vmul.f32 %v670, %v467
      %v725 = vmul.f32 %v670, %v532
      %v726 = vmul.f32 %v670, %v597
      %v727 = vmul.f32 %v670, %v405
      %v728 = vmul.f32 %v670, %v470
      %v729 = vmul.f32 %v670, %v535
      %v730 = vmul.f32 %v670, %v600
      %v731 = vmul.f32 %v670, %v408
      %v732 = vmul.f32 %v670, %v473
      %v733 = vmul.f32 %v670, %v538
      %v734 = vmul.f32 %v670, %v603
      %v735 = vsel %vm606, %v363, %v671
      %v736 = vsel %vm607, %v428, %v672
      %v737 = vsel %vm608, %v493, %v673
      %v738 = vsel %vm609, %v558, %v674
      %v739 = vsel %vm610, %v366, %v675
      %v740 = vsel %vm611, %v431, %v676
      %v741 = vsel %vm612, %v496, %v677
      %v742 = vsel %vm613, %v561, %v678
      %v743 = vsel %vm614, %v369, %v679
      %v744 = vsel %vm615, %v434, %v680
      %v745 = vsel %vm616, %v499, %v681
      %v746 = vsel %vm617, %v564, %v682
      %v747 = vsel %vm618, %v372, %v683
      %v748 = vsel %vm619, %v437, %v684
      %v749 = vsel %vm620, %v502, %v685
      %v750 = vsel %vm621, %v567, %v686
      %v751 = vsel %vm622, %v375, %v687
      %v752 = vsel %vm623, %v440, %v688
      %v753 = vsel %vm624, %v505, %v689
      %v754 = vsel %vm625, %v570, %v690
      %v755 = vsel %vm626, %v378, %v691
      %v756 = vsel %vm627, %v443, %v692
      %v757 = vsel %vm628, %v508, %v693
      %v758 = vsel %vm629, %v573, %v694
      %v759 = vsel %vm630, %v381, %v695
      %v760 = vsel %vm631, %v446, %v696
      %v761 = vsel %vm632, %v511, %v697
      %v762 = vsel %vm633, %v576, %v698
      %v763 = vsel %vm634, %v384, %v699
      %v764 = vsel %vm635, %v449, %v700
      %v765 = vsel %vm636, %v514, %v701
      %v766 = vsel %vm637, %v579, %v702
      %v767 = vsel %vm638, %v387, %v703
      %v768 = vsel %vm639, %v452, %v704
      %v769 = vsel %vm640, %v517, %v705
      %v770 = vsel %vm641, %v582, %v706
      %v771 = vsel %vm642, %v390, %v707
      %v772 = vsel %vm643, %v455, %v708
      %v773 = vsel %vm644, %v520, %v709
      %v774 = vsel %vm645, %v585, %v710
      %v775 = vsel %vm646, %v393, %v711
      %v776 = vsel %vm647, %v458, %v712
      %v777 = vsel %vm648, %v523, %v713
      %v778 = vsel %vm649, %v588, %v714
      %v779 = vsel %vm650, %v396, %v715
      %v780 = vsel %vm651, %v461, %v716
      %v781 = vsel %vm652, %v526, %v717
      %v782 = vsel %vm653, %v591, %v718
      %v783 = vsel %vm654, %v399, %v719
      %v784 = vsel %vm655, %v464, %v720
      %v785 = vsel %vm656, %v529, %v721
      %v786 = vsel %vm657, %v594, %v722
      %v787 = vsel %vm658, %v402, %v723
      %v788 = vsel %vm659, %v467, %v724
      %v789 = vsel %vm660, %v532, %v725
      %v790 = vsel %vm661, %v597, %v726
      %v791 = vsel %vm662, %v405, %v727
      %v792 = vsel %vm663, %v470, %v728
      %v793 = vsel %vm664, %v535, %v729
      %v794 = vsel %vm665, %v600, %v730
      %v795 = vsel %vm666, %v408, %v731
      %v796 = vsel %vm667, %v473, %v732
      %v797 = vsel %vm668, %v538, %v733
      %v798 = vsel %vm669, %v603, %v734
      %v799 = vld [vmem:[#allocation9] sm:$0xff]
      %v800 = vld [vmem:[#allocation9 + $0x8] sm:$0xff]
      %v801 = vld [vmem:[#allocation9 + $0x10] sm:$0xff]
      %v802 = vld [vmem:[#allocation9 + $0x18] sm:$0xff]
      %v803 = vld [vmem:[#allocation9 + $0x20] sm:$0xff]
      %v804 = vld [vmem:[#allocation9 + $0x28] sm:$0xff]
      %v805 = vld [vmem:[#allocation9 + $0x30] sm:$0xff]
      %v806 = vld [vmem:[#allocation9 + $0x38] sm:$0xff]
      %v807 = vld [vmem:[#allocation9 + $0x40] sm:$0xff]
      %v808 = vld [vmem:[#allocation9 + $0x48] sm:$0xff]
      %v809 = vld [vmem:[#allocation9 + $0x50] sm:$0xff]
      %v810 = vld [vmem:[#allocation9 + $0x58] sm:$0xff]
      %v811 = vld [vmem:[#allocation9 + $0x60] sm:$0xff]
      %v812 = vld [vmem:[#allocation9 + $0x68] sm:$0xff]
      %v813 = vld [vmem:[#allocation9 + $0x70] sm:$0xff]
      %v814 = vld [vmem:[#allocation9 + $0x78] sm:$0xff]
      %v815 = vld [vmem:[#allocation9 + $0x80] sm:$0xff]
      %v816 = vld [vmem:[#allocation9 + $0x88] sm:$0xff]
      %v817 = vld [vmem:[#allocation9 + $0x90] sm:$0xff]
      %v818 = vld [vmem:[#allocation9 + $0x98] sm:$0xff]
      %v819 = vld [vmem:[#allocation9 + $0xa0] sm:$0xff]
      %v820 = vld [vmem:[#allocation9 + $0xa8] sm:$0xff]
      %v821 = vld [vmem:[#allocation9 + $0xb0] sm:$0xff]
      %v822 = vld [vmem:[#allocation9 + $0xb8] sm:$0xff]
      %v823 = vld [vmem:[#allocation9 + $0xc0] sm:$0xff]
      %v824 = vld [vmem:[#allocation9 + $0xc8] sm:$0xff]
      %v825 = vld [vmem:[#allocation9 + $0xd0] sm:$0xff]
      %v826 = vld [vmem:[#allocation9 + $0xd8] sm:$0xff]
      %v827 = vld [vmem:[#allocation9 + $0xe0] sm:$0xff]
      %v828 = vld [vmem:[#allocation9 + $0xe8] sm:$0xff]
      %v829 = vld [vmem:[#allocation9 + $0xf0] sm:$0xff]
      %v830 = vld [vmem:[#allocation9 + $0xf8] sm:$0xff]
      %v831 = vld [vmem:[#allocation9 + $0x100] sm:$0xff]
      %v832 = vld [vmem:[#allocation9 + $0x108] sm:$0xff]
      %v833 = vld [vmem:[#allocation9 + $0x110] sm:$0xff]
      %v834 = vld [vmem:[#allocation9 + $0x118] sm:$0xff]
      %v835 = vld [vmem:[#allocation9 + $0x120] sm:$0xff]
      %v836 = vld [vmem:[#allocation9 + $0x128] sm:$0xff]
      %v837 = vld [vmem:[#allocation9 + $0x130] sm:$0xff]
      %v838 = vld [vmem:[#allocation9 + $0x138] sm:$0xff]
      %v839 = vld [vmem:[#allocation9 + $0x140] sm:$0xff]
      %v840 = vld [vmem:[#allocation9 + $0x148] sm:$0xff]
      %v841 = vld [vmem:[#allocation9 + $0x150] sm:$0xff]
      %v842 = vld [vmem:[#allocation9 + $0x158] sm:$0xff]
      %v843 = vld [vmem:[#allocation9 + $0x160] sm:$0xff]
      %v844 = vld [vmem:[#allocation9 + $0x168] sm:$0xff]
      %v845 = vld [vmem:[#allocation9 + $0x170] sm:$0xff]
      %v846 = vld [vmem:[#allocation9 + $0x178] sm:$0xff]
      %v847 = vld [vmem:[#allocation9 + $0x180] sm:$0xff]
      %v848 = vld [vmem:[#allocation9 + $0x188] sm:$0xff]
      %v849 = vld [vmem:[#allocation9 + $0x190] sm:$0xff]
      %v850 = vld [vmem:[#allocation9 + $0x198] sm:$0xff]
      %v851 = vld [vmem:[#allocation9 + $0x1a0] sm:$0xff]
      %v852 = vld [vmem:[#allocation9 + $0x1a8] sm:$0xff]
      %v853 = vld [vmem:[#allocation9 + $0x1b0] sm:$0xff]
      %v854 = vld [vmem:[#allocation9 + $0x1b8] sm:$0xff]
      %v855 = vld [vmem:[#allocation9 + $0x1c0] sm:$0xff]
      %v856 = vld [vmem:[#allocation9 + $0x1c8] sm:$0xff]
      %v857 = vld [vmem:[#allocation9 + $0x1d0] sm:$0xff]
      %v858 = vld [vmem:[#allocation9 + $0x1d8] sm:$0xff]
      %v859 = vld [vmem:[#allocation9 + $0x1e0] sm:$0xff]
      %v860 = vld [vmem:[#allocation9 + $0x1e8] sm:$0xff]
      %v861 = vld [vmem:[#allocation9 + $0x1f0] sm:$0xff]
      %v862 = vld [vmem:[#allocation9 + $0x1f8] sm:$0xff]
      %v863 = vld [vmem:[%s6] sm:$0x1]
      %v865 = vperm.slane %v863, 0
      %867 = vmatpush.msra.mxu0 %v814
      %868 = vmatpush.msra.mxu0 %v813
      %869 = vmatpush.msra.mxu0 %v812
      %870 = vmatpush.msra.mxu0 %v811
      %871 = vmatpush.msra.mxu0 %v810
      %872 = vmatpush.msra.mxu0 %v809
      %873 = vmatpush.msra.mxu0 %v808
      %874 = vmatpush.msra.mxu0 %v807
      %875 = vmatpush.msra.mxu0 %v806
      %876 = vmatpush.msra.mxu0 %v805
      %877 = vmatpush.msra.mxu0 %v804
      %878 = vmatpush.msra.mxu0 %v803
      %879 = vmatpush.msra.mxu0 %v802
      %880 = vmatpush.msra.mxu0 %v801
      %881 = vmatpush.msra.mxu0 %v800
      %882 = vmatpush.msra.mxu0 %v799
      %883 = vmatmul.f32.gmra.mxu0 %v735
      %v884 = vpop.f32.mrf.mxu0
      %v885 = vadd.f32 %v865, %v884
      %886 = vmatmul.f32.gmra.mxu0 %v739
      %v887 = vpop.f32.mrf.mxu0
      %v888 = vadd.f32 %v865, %v887
      %889 = vmatmul.f32.gmra.mxu0 %v743
      %v890 = vpop.f32.mrf.mxu0
      %v891 = vadd.f32 %v865, %v890
      %892 = vmatmul.f32.gmra.mxu0 %v747
      %v893 = vpop.f32.mrf.mxu0
      %v894 = vadd.f32 %v865, %v893
      %895 = vmatmul.f32.gmra.mxu0 %v751
      %v896 = vpop.f32.mrf.mxu0
      %v897 = vadd.f32 %v865, %v896
      %898 = vmatmul.f32.gmra.mxu0 %v755
      %v899 = vpop.f32.mrf.mxu0
      %v900 = vadd.f32 %v865, %v899
      %901 = vmatmul.f32.gmra.mxu0 %v759
      %v902 = vpop.f32.mrf.mxu0
      %v903 = vadd.f32 %v865, %v902
      %904 = vmatmul.f32.gmra.mxu0 %v763
      %v905 = vpop.f32.mrf.mxu0
      %v906 = vadd.f32 %v865, %v905
      %907 = vmatmul.f32.gmra.mxu0 %v767
      %v908 = vpop.f32.mrf.mxu0
      %v909 = vadd.f32 %v865, %v908
      %910 = vmatmul.f32.gmra.mxu0 %v771
      %v911 = vpop.f32.mrf.mxu0
      %v912 = vadd.f32 %v865, %v911
      %913 = vmatmul.f32.gmra.mxu0 %v775
      %v914 = vpop.f32.mrf.mxu0
      %v915 = vadd.f32 %v865, %v914
      %916 = vmatmul.f32.gmra.mxu0 %v779
      %v917 = vpop.f32.mrf.mxu0
      %v918 = vadd.f32 %v865, %v917
      %919 = vmatmul.f32.gmra.mxu0 %v783
      %v920 = vpop.f32.mrf.mxu0
      %v921 = vadd.f32 %v865, %v920
      %922 = vmatmul.f32.gmra.mxu0 %v787
      %v923 = vpop.f32.mrf.mxu0
      %v924 = vadd.f32 %v865, %v923
      %925 = vmatmul.f32.gmra.mxu0 %v791
      %v926 = vpop.f32.mrf.mxu0
      %v927 = vadd.f32 %v865, %v926
      %928 = vmatmul.f32.gmra.mxu0 %v795
      %v929 = vpop.f32.mrf.mxu0
      %v930 = vadd.f32 %v865, %v929
      %931 = vdwg.mxu0
      %932 = vmatpush.msra.mxu0 %v830
      %933 = vmatpush.msra.mxu0 %v829
      %934 = vmatpush.msra.mxu0 %v828
      %935 = vmatpush.msra.mxu0 %v827
      %936 = vmatpush.msra.mxu0 %v826
      %937 = vmatpush.msra.mxu0 %v825
      %938 = vmatpush.msra.mxu0 %v824
      %939 = vmatpush.msra.mxu0 %v823
      %940 = vmatpush.msra.mxu0 %v822
      %941 = vmatpush.msra.mxu0 %v821
      %942 = vmatpush.msra.mxu0 %v820
      %943 = vmatpush.msra.mxu0 %v819
      %944 = vmatpush.msra.mxu0 %v818
      %945 = vmatpush.msra.mxu0 %v817
      %946 = vmatpush.msra.mxu0 %v816
      %947 = vmatpush.msra.mxu0 %v815
      %948 = vmatmul.f32.gmra.mxu0 %v736
      %v949 = vpop.f32.mrf.mxu0
      %v950 = vadd.f32 %v885, %v949
      %951 = vmatmul.f32.gmra.mxu0 %v740
      %v952 = vpop.f32.mrf.mxu0
      %v953 = vadd.f32 %v888, %v952
      %954 = vmatmul.f32.gmra.mxu0 %v744
      %v955 = vpop.f32.mrf.mxu0
      %v956 = vadd.f32 %v891, %v955
      %957 = vmatmul.f32.gmra.mxu0 %v748
      %v958 = vpop.f32.mrf.mxu0
      %v959 = vadd.f32 %v894, %v958
      %960 = vmatmul.f32.gmra.mxu0 %v752
      %v961 = vpop.f32.mrf.mxu0
      %v962 = vadd.f32 %v897, %v961
      %963 = vmatmul.f32.gmra.mxu0 %v756
      %v964 = vpop.f32.mrf.mxu0
      %v965 = vadd.f32 %v900, %v964
      %966 = vmatmul.f32.gmra.mxu0 %v760
      %v967 = vpop.f32.mrf.mxu0
      %v968 = vadd.f32 %v903, %v967
      %969 = vmatmul.f32.gmra.mxu0 %v764
      %v970 = vpop.f32.mrf.mxu0
      %v971 = vadd.f32 %v906, %v970
      %972 = vmatmul.f32.gmra.mxu0 %v768
      %v973 = vpop.f32.mrf.mxu0
      %v974 = vadd.f32 %v909, %v973
      %975 = vmatmul.f32.gmra.mxu0 %v772
      %v976 = vpop.f32.mrf.mxu0
      %v977 = vadd.f32 %v912, %v976
      %978 = vmatmul.f32.gmra.mxu0 %v776
      %v979 = vpop.f32.mrf.mxu0
      %v980 = vadd.f32 %v915, %v979
      %981 = vmatmul.f32.gmra.mxu0 %v780
      %v982 = vpop.f32.mrf.mxu0
      %v983 = vadd.f32 %v918, %v982
      %984 = vmatmul.f32.gmra.mxu0 %v784
      %v985 = vpop.f32.mrf.mxu0
      %v986 = vadd.f32 %v921, %v985
      %987 = vmatmul.f32.gmra.mxu0 %v788
      %v988 = vpop.f32.mrf.mxu0
      %v989 = vadd.f32 %v924, %v988
      %990 = vmatmul.f32.gmra.mxu0 %v792
      %v991 = vpop.f32.mrf.mxu0
      %v992 = vadd.f32 %v927, %v991
      %993 = vmatmul.f32.gmra.mxu0 %v796
      %v994 = vpop.f32.mrf.mxu0
      %v995 = vadd.f32 %v930, %v994
      %996 = vdwg.mxu0
      %997 = vmatpush.msra.mxu0 %v846
      %998 = vmatpush.msra.mxu0 %v845
      %999 = vmatpush.msra.mxu0 %v844
      %1000 = vmatpush.msra.mxu0 %v843
      %1001 = vmatpush.msra.mxu0 %v842
      %1002 = vmatpush.msra.mxu0 %v841
      %1003 = vmatpush.msra.mxu0 %v840
      %1004 = vmatpush.msra.mxu0 %v839
      %1005 = vmatpush.msra.mxu0 %v838
      %1006 = vmatpush.msra.mxu0 %v837
      %1007 = vmatpush.msra.mxu0 %v836
      %1008 = vmatpush.msra.mxu0 %v835
      %1009 = vmatpush.msra.mxu0 %v834
      %1010 = vmatpush.msra.mxu0 %v833
      %1011 = vmatpush.msra.mxu0 %v832
      %1012 = vmatpush.msra.mxu0 %v831
      %1013 = vmatmul.f32.gmra.mxu0 %v737
      %v1014 = vpop.f32.mrf.mxu0
      %v1015 = vadd.f32 %v950, %v1014
      %1016 = vmatmul.f32.gmra.mxu0 %v741
      %v1017 = vpop.f32.mrf.mxu0
      %v1018 = vadd.f32 %v953, %v1017
      %1019 = vmatmul.f32.gmra.mxu0 %v745
      %v1020 = vpop.f32.mrf.mxu0
      %v1021 = vadd.f32 %v956, %v1020
      %1022 = vmatmul.f32.gmra.mxu0 %v749
      %v1023 = vpop.f32.mrf.mxu0
      %v1024 = vadd.f32 %v959, %v1023
      %1025 = vmatmul.f32.gmra.mxu0 %v753
      %v1026 = vpop.f32.mrf.mxu0
      %v1027 = vadd.f32 %v962, %v1026
      %1028 = vmatmul.f32.gmra.mxu0 %v757
      %v1029 = vpop.f32.mrf.mxu0
      %v1030 = vadd.f32 %v965, %v1029
      %1031 = vmatmul.f32.gmra.mxu0 %v761
      %v1032 = vpop.f32.mrf.mxu0
      %v1033 = vadd.f32 %v968, %v1032
      %1034 = vmatmul.f32.gmra.mxu0 %v765
      %v1035 = vpop.f32.mrf.mxu0
      %v1036 = vadd.f32 %v971, %v1035
      %1037 = vmatmul.f32.gmra.mxu0 %v769
      %v1038 = vpop.f32.mrf.mxu0
      %v1039 = vadd.f32 %v974, %v1038
      %1040 = vmatmul.f32.gmra.mxu0 %v773
      %v1041 = vpop.f32.mrf.mxu0
      %v1042 = vadd.f32 %v977, %v1041
      %1043 = vmatmul.f32.gmra.mxu0 %v777
      %v1044 = vpop.f32.mrf.mxu0
      %v1045 = vadd.f32 %v980, %v1044
      %1046 = vmatmul.f32.gmra.mxu0 %v781
      %v1047 = vpop.f32.mrf.mxu0
      %v1048 = vadd.f32 %v983, %v1047
      %1049 = vmatmul.f32.gmra.mxu0 %v785
      %v1050 = vpop.f32.mrf.mxu0
      %v1051 = vadd.f32 %v986, %v1050
      %1052 = vmatmul.f32.gmra.mxu0 %v789
      %v1053 = vpop.f32.mrf.mxu0
      %v1054 = vadd.f32 %v989, %v1053
      %1055 = vmatmul.f32.gmra.mxu0 %v793
      %v1056 = vpop.f32.mrf.mxu0
      %v1057 = vadd.f32 %v992, %v1056
      %1058 = vmatmul.f32.gmra.mxu0 %v797
      %v1059 = vpop.f32.mrf.mxu0
      %v1060 = vadd.f32 %v995, %v1059
      %1061 = vdwg.mxu0
      %1062 = vmatpush.msra.mxu0 %v862
      %1063 = vmatpush.msra.mxu0 %v861
      %1064 = vmatpush.msra.mxu0 %v860
      %1065 = vmatpush.msra.mxu0 %v859
      %1066 = vmatpush.msra.mxu0 %v858
      %1067 = vmatpush.msra.mxu0 %v857
      %1068 = vmatpush.msra.mxu0 %v856
      %1069 = vmatpush.msra.mxu0 %v855
      %1070 = vmatpush.msra.mxu0 %v854
      %1071 = vmatpush.msra.mxu0 %v853
      %1072 = vmatpush.msra.mxu0 %v852
      %1073 = vmatpush.msra.mxu0 %v851
      %1074 = vmatpush.msra.mxu0 %v850
      %1075 = vmatpush.msra.mxu0 %v849
      %1076 = vmatpush.msra.mxu0 %v848
      %1077 = vmatpush.msra.mxu0 %v847
      %1078 = vmatmul.f32.gmra.mxu0 %v738
      %v1079 = vpop.f32.mrf.mxu0
      %v1080 = vadd.f32 %v1015, %v1079
      %1081 = vmatmul.f32.gmra.mxu0 %v742
      %v1082 = vpop.f32.mrf.mxu0
      %v1083 = vadd.f32 %v1018, %v1082
      %1084 = vmatmul.f32.gmra.mxu0 %v746
      %v1085 = vpop.f32.mrf.mxu0
      %v1086 = vadd.f32 %v1021, %v1085
      %1087 = vmatmul.f32.gmra.mxu0 %v750
      %v1088 = vpop.f32.mrf.mxu0
      %v1089 = vadd.f32 %v1024, %v1088
      %1090 = vmatmul.f32.gmra.mxu0 %v754
      %v1091 = vpop.f32.mrf.mxu0
      %v1092 = vadd.f32 %v1027, %v1091
      %1093 = vmatmul.f32.gmra.mxu0 %v758
      %v1094 = vpop.f32.mrf.mxu0
      %v1095 = vadd.f32 %v1030, %v1094
      %1096 = vmatmul.f32.gmra.mxu0 %v762
      %v1097 = vpop.f32.mrf.mxu0
      %v1098 = vadd.f32 %v1033, %v1097
      %1099 = vmatmul.f32.gmra.mxu0 %v766
      %v1100 = vpop.f32.mrf.mxu0
      %v1101 = vadd.f32 %v1036, %v1100
      %1102 = vmatmul.f32.gmra.mxu0 %v770
      %v1103 = vpop.f32.mrf.mxu0
      %v1104 = vadd.f32 %v1039, %v1103
      %1105 = vmatmul.f32.gmra.mxu0 %v774
      %v1106 = vpop.f32.mrf.mxu0
      %v1107 = vadd.f32 %v1042, %v1106
      %1108 = vmatmul.f32.gmra.mxu0 %v778
      %v1109 = vpop.f32.mrf.mxu0
      %v1110 = vadd.f32 %v1045, %v1109
      %1111 = vmatmul.f32.gmra.mxu0 %v782
      %v1112 = vpop.f32.mrf.mxu0
      %v1113 = vadd.f32 %v1048, %v1112
      %1114 = vmatmul.f32.gmra.mxu0 %v786
      %v1115 = vpop.f32.mrf.mxu0
      %v1116 = vadd.f32 %v1051, %v1115
      %1117 = vmatmul.f32.gmra.mxu0 %v790
      %v1118 = vpop.f32.mrf.mxu0
      %v1119 = vadd.f32 %v1054, %v1118
      %1120 = vmatmul.f32.gmra.mxu0 %v794
      %v1121 = vpop.f32.mrf.mxu0
      %v1122 = vadd.f32 %v1057, %v1121
      %1123 = vmatmul.f32.gmra.mxu0 %v798
      %v1124 = vpop.f32.mrf.mxu0
      %v1125 = vadd.f32 %v1060, %v1124
      %1126 = vdwg.mxu0
      %1127 = vst [vmem:[#allocation10] sm:$0xff] %v1080
      %1128 = vst [vmem:[#allocation10 + $0x8] sm:$0xff] %v1083
      %1129 = vst [vmem:[#allocation10 + $0x10] sm:$0xff] %v1086
      %1130 = vst [vmem:[#allocation10 + $0x18] sm:$0xff] %v1089
      %1131 = vst [vmem:[#allocation10 + $0x20] sm:$0xff] %v1092
      %1132 = vst [vmem:[#allocation10 + $0x28] sm:$0xff] %v1095
      %1133 = vst [vmem:[#allocation10 + $0x30] sm:$0xff] %v1098
      %1134 = vst [vmem:[#allocation10 + $0x38] sm:$0xff] %v1101
      %1135 = vst [vmem:[#allocation10 + $0x40] sm:$0xff] %v1104
      %1136 = vst [vmem:[#allocation10 + $0x48] sm:$0xff] %v1107
      %1137 = vst [vmem:[#allocation10 + $0x50] sm:$0xff] %v1110
      %1138 = vst [vmem:[#allocation10 + $0x58] sm:$0xff] %v1113
      %1139 = vst [vmem:[#allocation10 + $0x60] sm:$0xff] %v1116
      %1140 = vst [vmem:[#allocation10 + $0x68] sm:$0xff] %v1119
      %1141 = vst [vmem:[#allocation10 + $0x70] sm:$0xff] %v1122
      %1142 = vst [vmem:[#allocation10 + $0x78] sm:$0xff] %v1125
      %v1143 = vld [vmem:[%s7] sm:$0xff]
      %v1144 = vld [vmem:[%s7 + $0x8] sm:$0xff]
      %v1145 = vld [vmem:[%s7 + $0x10] sm:$0xff]
      %v1146 = vld [vmem:[%s7 + $0x18] sm:$0xff]
      %v1147 = vld [vmem:[%s7 + $0x20] sm:$0xff]
      %v1148 = vld [vmem:[%s7 + $0x28] sm:$0xff]
      %v1149 = vld [vmem:[%s7 + $0x30] sm:$0xff]
      %v1150 = vld [vmem:[%s7 + $0x38] sm:$0xff]
      %v1151 = vld [vmem:[%s7 + $0x40] sm:$0xff]
      %v1152 = vld [vmem:[%s7 + $0x48] sm:$0xff]
      %v1153 = vld [vmem:[%s7 + $0x50] sm:$0xff]
      %v1154 = vld [vmem:[%s7 + $0x58] sm:$0xff]
      %v1155 = vld [vmem:[%s7 + $0x60] sm:$0xff]
      %v1156 = vld [vmem:[%s7 + $0x68] sm:$0xff]
      %v1157 = vld [vmem:[%s7 + $0x70] sm:$0xff]
      %v1158 = vld [vmem:[%s7 + $0x78] sm:$0xff]
      %1160 = vset.pattern.permute.xlu0 0
      %1161 = vperm.xlu0 %1160, %v1143
      %v1162 = vpop.permute.xlu0 %1161
      %1165 = vset.pattern.permute.xlu0 0
      %1166 = vperm.xlu0 %1165, %v1144
      %v1167 = vpop.permute.xlu0 %1166
      %1170 = vset.pattern.permute.xlu0 0
      %1171 = vperm.xlu0 %1170, %v1145
      %v1172 = vpop.permute.xlu0 %1171
      %1175 = vset.pattern.permute.xlu0 0
      %1176 = vperm.xlu0 %1175, %v1146
      %v1177 = vpop.permute.xlu0 %1176
      %1180 = vset.pattern.permute.xlu0 0
      %1181 = vperm.xlu0 %1180, %v1147
      %v1182 = vpop.permute.xlu0 %1181
      %1185 = vset.pattern.permute.xlu0 0
      %1186 = vperm.xlu0 %1185, %v1148
      %v1187 = vpop.permute.xlu0 %1186
      %1190 = vset.pattern.permute.xlu0 0
      %1191 = vperm.xlu0 %1190, %v1149
      %v1192 = vpop.permute.xlu0 %1191
      %1195 = vset.pattern.permute.xlu0 0
      %1196 = vperm.xlu0 %1195, %v1150
      %v1197 = vpop.permute.xlu0 %1196
      %1200 = vset.pattern.permute.xlu0 0
      %1201 = vperm.xlu0 %1200, %v1151
      %v1202 = vpop.permute.xlu0 %1201
      %1205 = vset.pattern.permute.xlu0 0
      %1206 = vperm.xlu0 %1205, %v1152
      %v1207 = vpop.permute.xlu0 %1206
      %1210 = vset.pattern.permute.xlu0 0
      %1211 = vperm.xlu0 %1210, %v1153
      %v1212 = vpop.permute.xlu0 %1211
      %1215 = vset.pattern.permute.xlu0 0
      %1216 = vperm.xlu0 %1215, %v1154
      %v1217 = vpop.permute.xlu0 %1216
      %1220 = vset.pattern.permute.xlu0 0
      %1221 = vperm.xlu0 %1220, %v1155
      %v1222 = vpop.permute.xlu0 %1221
      %1225 = vset.pattern.permute.xlu0 0
      %1226 = vperm.xlu0 %1225, %v1156
      %v1227 = vpop.permute.xlu0 %1226
      %1230 = vset.pattern.permute.xlu0 0
      %1231 = vperm.xlu0 %1230, %v1157
      %v1232 = vpop.permute.xlu0 %1231
      %1235 = vset.pattern.permute.xlu0 0
      %1236 = vperm.xlu0 %1235, %v1158
      %v1237 = vpop.permute.xlu0 %1236
      %v1239 = vmul.f32 %v1080, %v1162
      %v1240 = vmul.f32 %v1083, %v1167
      %v1241 = vmul.f32 %v1086, %v1172
      %v1242 = vmul.f32 %v1089, %v1177
      %v1243 = vmul.f32 %v1092, %v1182
      %v1244 = vmul.f32 %v1095, %v1187
      %v1245 = vmul.f32 %v1098, %v1192
      %v1246 = vmul.f32 %v1101, %v1197
      %v1247 = vmul.f32 %v1104, %v1202
      %v1248 = vmul.f32 %v1107, %v1207
      %v1249 = vmul.f32 %v1110, %v1212
      %v1250 = vmul.f32 %v1113, %v1217
      %v1251 = vmul.f32 %v1116, %v1222
      %v1252 = vmul.f32 %v1119, %v1227
      %v1253 = vmul.f32 %v1122, %v1232
      %v1254 = vmul.f32 %v1125, %v1237
      %v1255 = vadd.f32 %v1239, %v1240
      %v1256 = vadd.f32 %v1255, %v1241
      %v1257 = vadd.f32 %v1256, %v1242
      %v1258 = vadd.f32 %v1257, %v1243
      %v1259 = vadd.f32 %v1258, %v1244
      %v1260 = vadd.f32 %v1259, %v1245
      %v1261 = vadd.f32 %v1260, %v1246
      %v1262 = vadd.f32 %v1261, %v1247
      %v1263 = vadd.f32 %v1262, %v1248
      %v1264 = vadd.f32 %v1263, %v1249
      %v1265 = vadd.f32 %v1264, %v1250
      %v1266 = vadd.f32 %v1265, %v1251
      %v1267 = vadd.f32 %v1266, %v1252
      %v1268 = vadd.f32 %v1267, %v1253
      %v1269 = vadd.f32 %v1268, %v1254
      %v1270 = vrot.slane %v1269, 4
      %v1271 = vadd.f32 %v1269, %v1270
      %v1272 = vrot.slane %v1271, 2
      %v1273 = vadd.f32 %v1271, %v1272
      %v1274 = vrot.slane %v1273, 1
      %v1275 = vadd.f32 %v1273, %v1274
      %v1276 = vmul.f32 %v1239, %v1239
      %v1277 = vmul.f32 %v1240, %v1240
      %v1278 = vmul.f32 %v1241, %v1241
      %v1279 = vmul.f32 %v1242, %v1242
      %v1280 = vmul.f32 %v1243, %v1243
      %v1281 = vmul.f32 %v1244, %v1244
      %v1282 = vmul.f32 %v1245, %v1245
      %v1283 = vmul.f32 %v1246, %v1246
      %v1284 = vmul.f32 %v1247, %v1247
      %v1285 = vmul.f32 %v1248, %v1248
      %v1286 = vmul.f32 %v1249, %v1249
      %v1287 = vmul.f32 %v1250, %v1250
      %v1288 = vmul.f32 %v1251, %v1251
      %v1289 = vmul.f32 %v1252, %v1252
      %v1290 = vmul.f32 %v1253, %v1253
      %v1291 = vmul.f32 %v1254, %v1254
      %v1292 = vadd.f32 %v1276, %v1277
      %v1293 = vadd.f32 %v1292, %v1278
      %v1294 = vadd.f32 %v1293, %v1279
      %v1295 = vadd.f32 %v1294, %v1280
      %v1296 = vadd.f32 %v1295, %v1281
      %v1297 = vadd.f32 %v1296, %v1282
      %v1298 = vadd.f32 %v1297, %v1283
      %v1299 = vadd.f32 %v1298, %v1284
      %v1300 = vadd.f32 %v1299, %v1285
      %v1301 = vadd.f32 %v1300, %v1286
      %v1302 = vadd.f32 %v1301, %v1287
      %v1303 = vadd.f32 %v1302, %v1288
      %v1304 = vadd.f32 %v1303, %v1289
      %v1305 = vadd.f32 %v1304, %v1290
      %v1306 = vadd.f32 %v1305, %v1291
      %v1307 = vrot.slane %v1306, 4
      %v1308 = vadd.f32 %v1306, %v1307
      %v1309 = vrot.slane %v1308, 2
      %v1310 = vadd.f32 %v1308, %v1309
      %v1311 = vrot.slane %v1310, 1
      %v1312 = vadd.f32 %v1310, %v1311
      %vm1313 = vcmask 1040384
      %v1314 = vsel %vm1313, %v1275, %v1312
      %1315 = vst [vmem:[#allocation11] sm:$0x3] %v1314
    $region57: #{tpu_custom_call.1} parent=1 // pred_fallthru
      _
    // Predicated region
    $region58: #{tpu_custom_call.1} parent=1 // pred_check
      _
    $region59: #{tpu_custom_call.1} parent=1 // pred_check_branch
      %1317 = sbr.rel (0) target = $region61
    $region60: #{tpu_custom_call.1} parent=1 // pred_region
      %1319 = vsyncadd [#allocation6], 0
      %s1320 = sshll.u32 [#allocation10], 4
      %s1321 = int_to_ptr.vmem [resolvable:$true] %s1320
      %s1322 = sshll.u32 %s8, 4
      %s1323 = int_to_ptr.hbm [resolvable:$true] %s1322
      %1328 = dma.vmem_to_hbm [thread:$0]  %s1321, 2048, %s1323, [#allocation6], 128, 128, 8
    $region61: #{tpu_custom_call.1} parent=1 // pred_fallthru
      _
    // Predicated region
    $region62: #{tpu_custom_call.1} parent=1 // pred_check
      _
    $region63: #{tpu_custom_call.1} parent=1 // pred_check_branch
      %1330 = sbr.rel (0) target = $region65
    $region64: #{tpu_custom_call.1} parent=1 // pred_region
      %1332 = vsyncadd [#allocation12], 0
      %s1334 = sshll.u32 [#allocation11], 4
      %s1335 = int_to_ptr.vmem [resolvable:$true] %s1334
      %s1336 = sshll.u32 %s9, 4
      %s1337 = int_to_ptr.hbm [resolvable:$true] %s1336
      %1339 = dma.vmem_to_hbm [thread:$0]  %s1335, 32, %s1337, [#allocation12]
    $region65: #{tpu_custom_call.1} parent=1 // pred_fallthru
      _
    // Predicated region
    $region66: #{tpu_custom_call.1} parent=1 // pred_check
      _
    $region67: #{tpu_custom_call.1} parent=1 // pred_check_branch
      %1341 = sbr.rel (0) target = $region69
    $region68: #{tpu_custom_call.1} parent=1 // pred_region
      %1343 = dma.done [#allocation6], 2048
    $region69: #{tpu_custom_call.1} parent=1 // pred_fallthru
      _
    // Predicated region
    $region70: #{tpu_custom_call.1} parent=1 // pred_check
      _
    $region71: #{tpu_custom_call.1} parent=1 // pred_check_branch
      %1345 = sbr.rel (0) target = $region73
    $region72: #{tpu_custom_call.1} parent=1 // pred_region
      %1347 = dma.done [#allocation12], 32
    $region73: #{tpu_custom_call.1} parent=1 // pred_fallthru
      _
    %1348 = vsyncpa [#allocation5], 1
    %1349 = vsyncpa [#allocation8], 1
    %1350 = vsyncpa [#allocation6], 1
    %1351 = vsyncpa [#allocation12], 1

</llo_original>
